<compile_context>
chip_gen: v5e
topology: v5e:2x2
jax: 0.10.0
libtpu: 0.0.40
codegen_flags: <defaults>
</compile_context>

<pallas_src>
import functools
import math

import jax
import jax.numpy as jnp
from jax.experimental import pallas as pl
from jax.experimental.pallas import tpu as pltpu


def _coupling_kernel(xa_ref, xb_ref, wf_ref, tf_ref, wg_ref, tg_ref, m_ref, o_ref,
                     *, H, W, ch, b_blk, inverse):
    """Fused additive-coupling step on a block of b_blk images.

    xa_ref : (b_blk, 1, ch, HW)  first channel half  (x1 fwd / y1 inv)
    xb_ref : (b_blk, 1, ch, HW)  second channel half (x2 fwd / y2 inv)
    w*_ref : (9, ch, ch)         BN-folded conv weights, tap-major
    t*_ref : (ch, 1)             BN-folded conv bias / shift
    m_ref  : (9, 1, b_blk*HW)    per-tap zero-padding masks (lane-indexed)
    o_ref  : (b_blk, 2, ch, HW)  output block
    """
    HW = H * W
    L = b_blk * HW

    def gather_half(ref):
        # (b_blk, 1, ch, HW) -> lane-batched (ch, b_blk*HW).  HW is a multiple of 128,
        # so the concatenation is a lane-aligned vreg copy, not a masked relayout.
        if b_blk == 1:
            return ref[0, 0]
        return jnp.concatenate([ref[i, 0] for i in range(b_blk)], axis=1)

    a = gather_half(xa_ref)           # x1 (forward) / y1 (inverse)
    b = gather_half(xb_ref)           # x2 (forward) / y2 (inverse)

    offsets = [oy * W + ox for oy in (-1, 0, 1) for ox in (-1, 0, 1)]

    def conv_bn_relu(z, w_ref, t_ref):
        # 3x3 SAME conv as 9 tap-by-tap accumulating matmuls: roll the whole
        # lane-batched slab (XLU), apply the precomputed zero-pad mask (one VPU
        # multiply; cross-image leakage from the roll lands only on masked lanes),
        # then contract with the (ch, ch) weight slice on the MXU in f32.
        acc = None
        for t, off in enumerate(offsets):
            zt = pltpu.roll(z, shift=(-off) % L, axis=1) if off else z
            if t != 4:                                  # center tap: no border mask
                zt = zt * m_ref[t]
            part = jnp.dot(w_ref[t], zt, preferred_element_type=jnp.float32)
            acc = part if acc is None else acc + part
        return jnp.maximum(acc + t_ref[...], 0.0)

    if not inverse:
        first = a + conv_bn_relu(b, wf_ref, tf_ref)        # y1
        second = b + conv_bn_relu(first, wg_ref, tg_ref)   # y2
    else:
        second = b - conv_bn_relu(a, wg_ref, tg_ref)       # x2
        first = a - conv_bn_relu(second, wf_ref, tf_ref)   # x1

    # Direct per-image half writes (no big concatenate); lane slices are 128-aligned.
    for i in range(b_blk):
        sl = slice(i * HW, (i + 1) * HW)
        o_ref[i, 0] = first[:, sl].astype(o_ref.dtype)
        o_ref[i, 1] = second[:, sl].astype(o_ref.dtype)


@functools.partial(jax.jit, static_argnames=("H", "W", "b_blk", "inverse"))
def _coupling_call(x_r, wf, tf, wg, tg, *, H, W, b_blk, inverse):
    """x_r: (N, 2, ch, H*W) f32; wf/wg: (9, ch, ch); tf/tg: (ch, 1)."""
    N, _, ch, HW = x_r.shape
    steps = N // b_blk
    L = b_blk * HW
    itemsize = jnp.dtype(x_r.dtype).itemsize

    # Per-tap zero-padding masks, indexed by lane % HW so rolls over the batched lane
    # axis cannot leak across image boundaries.  Static shapes -> baked-in constants.
    lane = jnp.arange(L, dtype=jnp.int32)
    p = lane % HW
    row = p // W
    col = p % W
    masks = []
    for oy in (-1, 0, 1):
        for ox in (-1, 0, 1):
            m = jnp.ones((L,), jnp.bool_)
            if oy == -1:
                m = m & (row >= 1)
            elif oy == 1:
                m = m & (row <= H - 2)
            if ox == -1:
                m = m & (col >= 1)
            elif ox == 1:
                m = m & (col <= W - 2)
            masks.append(m)
    tap_masks = jnp.stack(masks, axis=0).astype(x_r.dtype)[:, None, :]   # (9, 1, L)

    kern = functools.partial(_coupling_kernel, H=H, W=W, ch=ch, b_blk=b_blk,
                             inverse=inverse)

    # VMEM budget: double-buffered streamed blocks + resident constants + temporaries.
    block_bytes = (2 * b_blk * ch * HW + b_blk * 2 * ch * HW) * itemsize
    const_bytes = (2 * 9 * ch * ch + 2 * ch + 9 * L) * itemsize
    temp_bytes = 16 * ch * L * 4
    vmem_need = 2 * (block_bytes + const_bytes) + temp_bytes
    vmem_limit = int(min(max(4 * vmem_need + (8 << 20), 16 << 20), 48 << 20))

    flops_per_image = 2 * (2 * ch * (9 * ch) * HW) + 8 * (2 * ch) * HW
    cost = pl.CostEstimate(
        flops=int(flops_per_image * N),
        transcendentals=0,
        bytes_accessed=int(2 * N * 2 * ch * HW * itemsize + const_bytes))

    grid_spec = pltpu.PrefetchScalarGridSpec(
        num_scalar_prefetch=0,
        grid=(steps,),
        in_specs=[
            pl.BlockSpec((b_blk, 1, ch, HW), lambda n: (n, 0, 0, 0)),  # x1/y1 half
            pl.BlockSpec((b_blk, 1, ch, HW), lambda n: (n, 1, 0, 0)),  # x2/y2 half
            pl.BlockSpec((9, ch, ch), lambda n: (0, 0, 0)),            # wf
            pl.BlockSpec((ch, 1), lambda n: (0, 0)),                   # tf
            pl.BlockSpec((9, ch, ch), lambda n: (0, 0, 0)),            # wg
            pl.BlockSpec((ch, 1), lambda n: (0, 0)),                   # tg
            pl.BlockSpec((9, 1, L), lambda n: (0, 0, 0)),              # tap masks
        ],
        out_specs=pl.BlockSpec((b_blk, 2, ch, HW), lambda n: (n, 0, 0, 0)),
    )

    return pl.pallas_call(
        kern,
        out_shape=jax.ShapeDtypeStruct((N, 2, ch, HW), x_r.dtype),
        grid_spec=grid_spec,
        compiler_params=pltpu.CompilerParams(
            dimension_semantics=("parallel",),
            vmem_limit_bytes=vmem_limit),
        cost_estimate=cost,
    )(x_r, x_r, wf, tf, wg, tg, tap_masks)


def _pick_block_batch(N, C, HW, itemsize=4, budget_bytes=8 << 20, min_steps=2):
    """Largest divisor of N that keeps >= min_steps grid steps (v7x megacore) and
    keeps the double-buffered per-step blocks inside a VMEM budget."""
    target_steps = min_steps if N >= min_steps else 1
    best = 1
    for d in range(1, N + 1):
        if N % d:
            continue
        if N // d < target_steps:
            continue
        if 4 * d * C * HW * itemsize > budget_bytes:
            continue
        best = max(best, d)
    return best


def _fold_block_params(w_oihw, b, s, t):
    """Fold conv bias + inference-mode BatchNorm affine into the conv parameters.

    Returns:
      w_k: (9, Cout, Cin) tap-major weights (tap = (oy+1)*3 + (ox+1)), BN scale folded.
      t_k: (Cout, 1) = b * s + t.
    """
    cout, cin = w_oihw.shape[0], w_oihw.shape[1]
    w_fold = w_oihw * s[:, None, None, None]
    w_k = jnp.transpose(w_fold, (2, 3, 0, 1)).reshape(9, cout, cin)
    t_k = (b * s + t).reshape(cout, 1)
    return w_k, t_k


class InvertibleBlock:
    """JAX/Pallas port of the memcnn-based InvertibleBlock (additive coupling)."""

    def __init__(self, params):
        self.p = params
        self._wf, self._tf = _fold_block_params(params["wf"], params["bf"],
                                                params["sf"], params["tf"])
        self._wg, self._tg = _fold_block_params(params["wg"], params["bg"],
                                                params["sg"], params["tg"])

    def __call__(self, x, inverse=False):
        N, C, H, W = x.shape
        ch = C // 2
        b_blk = _pick_block_batch(N, C, H * W)
        x_r = x.reshape(N, 2, ch, H * W)         # contiguous reshape, no data movement
        y_r = _coupling_call(x_r, self._wf, self._tf, self._wg, self._tg,
                             H=H, W=W, b_blk=b_blk, inverse=bool(inverse))
        return y_r.reshape(N, C, H, W)


def init_params(channels, key):
    """Deterministic synthetic init mirroring the PyTorch block's shapes (OIHW)."""
    ch = channels // 2
    kw, kb = jax.random.split(key)
    fan_in = ch * 9
    bound = 1.0 / math.sqrt(fan_in)
    wf = jax.random.uniform(kw, (ch, ch, 3, 3), jnp.float32, -bound, bound)   # OIHW
    bf = jax.random.uniform(kb, (ch,), jnp.float32, -bound, bound)
    eps = 1e-5
    sf = jnp.full((ch,), 1.0 / math.sqrt(1.0 + eps), jnp.float32)  # gamma/sqrt(var+eps)
    tf = jnp.zeros((ch,), jnp.float32)                             # beta - mean*scale
    # memcnn.AdditiveCoupling: Gm = copy.deepcopy(Fm) -> identical initial parameters.
    return dict(wf=wf, bf=bf, sf=sf, tf=tf, wg=wf, bg=bf, sg=sf, tg=tf)


# ---- pure-JAX reference (correctness check only) ----------------------------------
def _ref_branch(xres, z, w, b, s, t, sign):
    conv = jax.lax.conv_general_dilated(
        z, w, window_strides=(1, 1), padding="SAME",
        dimension_numbers=("NCHW", "OIHW", "NCHW"),
        precision=jax.lax.Precision.HIGHEST)
    aff = (conv + b[None, :, None, None]) * s[None, :, None, None] + t[None, :, None, None]
    return xres + sign * jax.nn.relu(aff)


def _ref_forward(x, p):
    x1, x2 = jnp.split(x, 2, axis=1)
    y1 = _ref_branch(x1, x2, p["wf"], p["bf"], p["sf"], p["tf"], 1.0)
    y2 = _ref_branch(x2, y1, p["wg"], p["bg"], p["sg"], p["tg"], 1.0)
    return jnp.concatenate([y1, y2], axis=1)


if __name__ == "__main__":
    key = jax.random.PRNGKey(0)
    kx, kp = jax.random.split(key)

    C, H, W = 8, 16, 16                          # NCHW, like the PyTorch module
    params = init_params(C, kp)
    block = InvertibleBlock(params)

    # N=4 exercises the lane-batched path (2 images per grid step, 2 parallel steps);
    # N=2 exercises the b_blk=1 fallback.
    for N in (4, 2):
        x = jax.random.normal(jax.random.fold_in(kx, N), (N, C, H, W), jnp.float32)

        y = jax.block_until_ready(block(x))
        assert y.shape == x.shape and y.dtype == x.dtype

        y_ref = _ref_forward(x, params)
        err_fwd = float(jnp.max(jnp.abs(y - y_ref)))
        assert jnp.allclose(y, y_ref, rtol=1e-3, atol=1e-3), (N, err_fwd)

        x_rec = jax.block_until_ready(block(y, inverse=True))
        err_inv = float(jnp.max(jnp.abs(x_rec - x)))
        assert jnp.allclose(x_rec, x, rtol=1e-3, atol=1e-3), (N, err_inv)

    print("KERNEL_OK")
</pallas_src>

<mosaic_0001>
module attributes {stable_mosaic.version = 11 : i64} {
  func.func @_coupling_kernel(%arg0: i32, %arg1: memref<2x1x4x256xf32, #tpu.memory_space<vmem>>, %arg2: memref<2x1x4x256xf32, #tpu.memory_space<vmem>>, %arg3: memref<9x4x4xf32, #tpu.memory_space<vmem>>, %arg4: memref<4x1xf32, #tpu.memory_space<vmem>>, %arg5: memref<9x4x4xf32, #tpu.memory_space<vmem>>, %arg6: memref<4x1xf32, #tpu.memory_space<vmem>>, %arg7: memref<9x1x512xf32, #tpu.memory_space<vmem>>, %arg8: memref<2x2x4x256xf32, #tpu.memory_space<vmem>>) attributes {dimension_semantics = [#tpu.dimension_semantics<parallel>], iteration_bounds = array<i64: 2>, scalar_prefetch = 0 : i64, scratch_operands = 0 : i64, tpu.core_type = #tpu.core_type<tc>, window_params = [{transform_indices = @transform_0, window_bounds = array<i64: 2, 1, 4, 256>}, {transform_indices = @transform_1, window_bounds = array<i64: 2, 1, 4, 256>}, {pipeline_mode = #tpu.pipeline_mode<synchronous>, transform_indices = @transform_2, window_bounds = array<i64: 9, 4, 4>}, {pipeline_mode = #tpu.pipeline_mode<synchronous>, transform_indices = @transform_3, window_bounds = array<i64: 4, 1>}, {pipeline_mode = #tpu.pipeline_mode<synchronous>, transform_indices = @transform_4, window_bounds = array<i64: 9, 4, 4>}, {pipeline_mode = #tpu.pipeline_mode<synchronous>, transform_indices = @transform_5, window_bounds = array<i64: 4, 1>}, {pipeline_mode = #tpu.pipeline_mode<synchronous>, transform_indices = @transform_6, window_bounds = array<i64: 9, 1, 512>}, {transform_indices = @transform_7, window_bounds = array<i64: 2, 2, 4, 256>}]} {
    %c0 = arith.constant 0 : index
    %c0_0 = arith.constant 0 : index
    %c0_1 = arith.constant 0 : index
    %c0_2 = arith.constant 0 : index
    %0 = vector.load %arg1[%c0, %c0_0, %c0_1, %c0_2] : memref<2x1x4x256xf32, #tpu.memory_space<vmem>>, vector<1x1x4x256xf32>
    %1 = vector.shape_cast %0 : vector<1x1x4x256xf32> to vector<4x256xf32>
    %c1 = arith.constant 1 : index
    %c0_3 = arith.constant 0 : index
    %c0_4 = arith.constant 0 : index
    %c0_5 = arith.constant 0 : index
    %2 = vector.load %arg1[%c1, %c0_3, %c0_4, %c0_5] : memref<2x1x4x256xf32, #tpu.memory_space<vmem>>, vector<1x1x4x256xf32>
    %3 = vector.shape_cast %2 : vector<1x1x4x256xf32> to vector<4x256xf32>
    %4 = tpu.concatenate %1, %3 in 1 : vector<4x256xf32>, vector<4x256xf32> -> vector<4x512xf32>
    %c0_6 = arith.constant 0 : index
    %c0_7 = arith.constant 0 : index
    %c0_8 = arith.constant 0 : index
    %c0_9 = arith.constant 0 : index
    %5 = vector.load %arg2[%c0_6, %c0_7, %c0_8, %c0_9] : memref<2x1x4x256xf32, #tpu.memory_space<vmem>>, vector<1x1x4x256xf32>
    %6 = vector.shape_cast %5 : vector<1x1x4x256xf32> to vector<4x256xf32>
    %c1_10 = arith.constant 1 : index
    %c0_11 = arith.constant 0 : index
    %c0_12 = arith.constant 0 : index
    %c0_13 = arith.constant 0 : index
    %7 = vector.load %arg2[%c1_10, %c0_11, %c0_12, %c0_13] : memref<2x1x4x256xf32, #tpu.memory_space<vmem>>, vector<1x1x4x256xf32>
    %8 = vector.shape_cast %7 : vector<1x1x4x256xf32> to vector<4x256xf32>
    %9 = tpu.concatenate %6, %8 in 1 : vector<4x256xf32>, vector<4x256xf32> -> vector<4x512xf32>
    %c17_i32 = arith.constant 17 : i32
    %10 = tpu.dynamic_rotate %9 by %c17_i32 dim 1 : vector<4x512xf32>, i32 -> vector<4x512xf32>
    %c0_14 = arith.constant 0 : index
    %c0_15 = arith.constant 0 : index
    %c0_16 = arith.constant 0 : index
    %11 = vector.load %arg7[%c0_14, %c0_15, %c0_16] : memref<9x1x512xf32, #tpu.memory_space<vmem>>, vector<1x1x512xf32>
    %12 = vector.shape_cast %11 : vector<1x1x512xf32> to vector<1x512xf32>
    %13 = vector.broadcast %12 : vector<1x512xf32> to vector<4x512xf32>
    %14 = arith.mulf %10, %13 : vector<4x512xf32>
    %c0_17 = arith.constant 0 : index
    %c0_18 = arith.constant 0 : index
    %c0_19 = arith.constant 0 : index
    %15 = vector.load %arg3[%c0_17, %c0_18, %c0_19] : memref<9x4x4xf32, #tpu.memory_space<vmem>>, vector<1x4x4xf32>
    %16 = vector.shape_cast %15 : vector<1x4x4xf32> to vector<4x4xf32>
    %cst = arith.constant dense<0.000000e+00> : vector<4x512xf32>
    %17 = tpu.matmul %16, %14, %cst {dimension_numbers = #tpu.dot_dimension_numbers<[1], [0], [0], [1], [0, 0, 1, 1], [], []>} : vector<4x4xf32>, vector<4x512xf32>, vector<4x512xf32> -> vector<4x512xf32>
    %c16_i32 = arith.constant 16 : i32
    %18 = tpu.dynamic_rotate %9 by %c16_i32 dim 1 : vector<4x512xf32>, i32 -> vector<4x512xf32>
    %c1_20 = arith.constant 1 : index
    %c0_21 = arith.constant 0 : index
    %c0_22 = arith.constant 0 : index
    %19 = vector.load %arg7[%c1_20, %c0_21, %c0_22] : memref<9x1x512xf32, #tpu.memory_space<vmem>>, vector<1x1x512xf32>
    %20 = vector.shape_cast %19 : vector<1x1x512xf32> to vector<1x512xf32>
    %21 = vector.broadcast %20 : vector<1x512xf32> to vector<4x512xf32>
    %22 = arith.mulf %18, %21 : vector<4x512xf32>
    %c1_23 = arith.constant 1 : index
    %c0_24 = arith.constant 0 : index
    %c0_25 = arith.constant 0 : index
    %23 = vector.load %arg3[%c1_23, %c0_24, %c0_25] : memref<9x4x4xf32, #tpu.memory_space<vmem>>, vector<1x4x4xf32>
    %24 = vector.shape_cast %23 : vector<1x4x4xf32> to vector<4x4xf32>
    %cst_26 = arith.constant dense<0.000000e+00> : vector<4x512xf32>
    %25 = tpu.matmul %24, %22, %cst_26 {dimension_numbers = #tpu.dot_dimension_numbers<[1], [0], [0], [1], [0, 0, 1, 1], [], []>} : vector<4x4xf32>, vector<4x512xf32>, vector<4x512xf32> -> vector<4x512xf32>
    %26 = arith.addf %17, %25 : vector<4x512xf32>
    %c15_i32 = arith.constant 15 : i32
    %27 = tpu.dynamic_rotate %9 by %c15_i32 dim 1 : vector<4x512xf32>, i32 -> vector<4x512xf32>
    %c2 = arith.constant 2 : index
    %c0_27 = arith.constant 0 : index
    %c0_28 = arith.constant 0 : index
    %28 = vector.load %arg7[%c2, %c0_27, %c0_28] : memref<9x1x512xf32, #tpu.memory_space<vmem>>, vector<1x1x512xf32>
    %29 = vector.shape_cast %28 : vector<1x1x512xf32> to vector<1x512xf32>
    %30 = vector.broadcast %29 : vector<1x512xf32> to vector<4x512xf32>
    %31 = arith.mulf %27, %30 : vector<4x512xf32>
    %c2_29 = arith.constant 2 : index
    %c0_30 = arith.constant 0 : index
    %c0_31 = arith.constant 0 : index
    %32 = vector.load %arg3[%c2_29, %c0_30, %c0_31] : memref<9x4x4xf32, #tpu.memory_space<vmem>>, vector<1x4x4xf32>
    %33 = vector.shape_cast %32 : vector<1x4x4xf32> to vector<4x4xf32>
    %cst_32 = arith.constant dense<0.000000e+00> : vector<4x512xf32>
    %34 = tpu.matmul %33, %31, %cst_32 {dimension_numbers = #tpu.dot_dimension_numbers<[1], [0], [0], [1], [0, 0, 1, 1], [], []>} : vector<4x4xf32>, vector<4x512xf32>, vector<4x512xf32> -> vector<4x512xf32>
    %35 = arith.addf %26, %34 : vector<4x512xf32>
    %c1_i32 = arith.constant 1 : i32
    %36 = tpu.dynamic_rotate %9 by %c1_i32 dim 1 : vector<4x512xf32>, i32 -> vector<4x512xf32>
    %c3 = arith.constant 3 : index
    %c0_33 = arith.constant 0 : index
    %c0_34 = arith.constant 0 : index
    %37 = vector.load %arg7[%c3, %c0_33, %c0_34] : memref<9x1x512xf32, #tpu.memory_space<vmem>>, vector<1x1x512xf32>
    %38 = vector.shape_cast %37 : vector<1x1x512xf32> to vector<1x512xf32>
    %39 = vector.broadcast %38 : vector<1x512xf32> to vector<4x512xf32>
    %40 = arith.mulf %36, %39 : vector<4x512xf32>
    %c3_35 = arith.constant 3 : index
    %c0_36 = arith.constant 0 : index
    %c0_37 = arith.constant 0 : index
    %41 = vector.load %arg3[%c3_35, %c0_36, %c0_37] : memref<9x4x4xf32, #tpu.memory_space<vmem>>, vector<1x4x4xf32>
    %42 = vector.shape_cast %41 : vector<1x4x4xf32> to vector<4x4xf32>
    %cst_38 = arith.constant dense<0.000000e+00> : vector<4x512xf32>
    %43 = tpu.matmul %42, %40, %cst_38 {dimension_numbers = #tpu.dot_dimension_numbers<[1], [0], [0], [1], [0, 0, 1, 1], [], []>} : vector<4x4xf32>, vector<4x512xf32>, vector<4x512xf32> -> vector<4x512xf32>
    %44 = arith.addf %35, %43 : vector<4x512xf32>
    %c4 = arith.constant 4 : index
    %c0_39 = arith.constant 0 : index
    %c0_40 = arith.constant 0 : index
    %45 = vector.load %arg3[%c4, %c0_39, %c0_40] : memref<9x4x4xf32, #tpu.memory_space<vmem>>, vector<1x4x4xf32>
    %46 = vector.shape_cast %45 : vector<1x4x4xf32> to vector<4x4xf32>
    %cst_41 = arith.constant dense<0.000000e+00> : vector<4x512xf32>
    %47 = tpu.matmul %46, %9, %cst_41 {dimension_numbers = #tpu.dot_dimension_numbers<[1], [0], [0], [1], [0, 0, 1, 1], [], []>} : vector<4x4xf32>, vector<4x512xf32>, vector<4x512xf32> -> vector<4x512xf32>
    %48 = arith.addf %44, %47 : vector<4x512xf32>
    %c511_i32 = arith.constant 511 : i32
    %49 = tpu.dynamic_rotate %9 by %c511_i32 dim 1 : vector<4x512xf32>, i32 -> vector<4x512xf32>
    %c5 = arith.constant 5 : index
    %c0_42 = arith.constant 0 : index
    %c0_43 = arith.constant 0 : index
    %50 = vector.load %arg7[%c5, %c0_42, %c0_43] : memref<9x1x512xf32, #tpu.memory_space<vmem>>, vector<1x1x512xf32>
    %51 = vector.shape_cast %50 : vector<1x1x512xf32> to vector<1x512xf32>
    %52 = vector.broadcast %51 : vector<1x512xf32> to vector<4x512xf32>
    %53 = arith.mulf %49, %52 : vector<4x512xf32>
    %c5_44 = arith.constant 5 : index
    %c0_45 = arith.constant 0 : index
    %c0_46 = arith.constant 0 : index
    %54 = vector.load %arg3[%c5_44, %c0_45, %c0_46] : memref<9x4x4xf32, #tpu.memory_space<vmem>>, vector<1x4x4xf32>
    %55 = vector.shape_cast %54 : vector<1x4x4xf32> to vector<4x4xf32>
    %cst_47 = arith.constant dense<0.000000e+00> : vector<4x512xf32>
    %56 = tpu.matmul %55, %53, %cst_47 {dimension_numbers = #tpu.dot_dimension_numbers<[1], [0], [0], [1], [0, 0, 1, 1], [], []>} : vector<4x4xf32>, vector<4x512xf32>, vector<4x512xf32> -> vector<4x512xf32>
    %57 = arith.addf %48, %56 : vector<4x512xf32>
    %c497_i32 = arith.constant 497 : i32
    %58 = tpu.dynamic_rotate %9 by %c497_i32 dim 1 : vector<4x512xf32>, i32 -> vector<4x512xf32>
    %c6 = arith.constant 6 : index
    %c0_48 = arith.constant 0 : index
    %c0_49 = arith.constant 0 : index
    %59 = vector.load %arg7[%c6, %c0_48, %c0_49] : memref<9x1x512xf32, #tpu.memory_space<vmem>>, vector<1x1x512xf32>
    %60 = vector.shape_cast %59 : vector<1x1x512xf32> to vector<1x512xf32>
    %61 = vector.broadcast %60 : vector<1x512xf32> to vector<4x512xf32>
    %62 = arith.mulf %58, %61 : vector<4x512xf32>
    %c6_50 = arith.constant 6 : index
    %c0_51 = arith.constant 0 : index
    %c0_52 = arith.constant 0 : index
    %63 = vector.load %arg3[%c6_50, %c0_51, %c0_52] : memref<9x4x4xf32, #tpu.memory_space<vmem>>, vector<1x4x4xf32>
    %64 = vector.shape_cast %63 : vector<1x4x4xf32> to vector<4x4xf32>
    %cst_53 = arith.constant dense<0.000000e+00> : vector<4x512xf32>
    %65 = tpu.matmul %64, %62, %cst_53 {dimension_numbers = #tpu.dot_dimension_numbers<[1], [0], [0], [1], [0, 0, 1, 1], [], []>} : vector<4x4xf32>, vector<4x512xf32>, vector<4x512xf32> -> vector<4x512xf32>
    %66 = arith.addf %57, %65 : vector<4x512xf32>
    %c496_i32 = arith.constant 496 : i32
    %67 = tpu.dynamic_rotate %9 by %c496_i32 dim 1 : vector<4x512xf32>, i32 -> vector<4x512xf32>
    %c7 = arith.constant 7 : index
    %c0_54 = arith.constant 0 : index
    %c0_55 = arith.constant 0 : index
    %68 = vector.load %arg7[%c7, %c0_54, %c0_55] : memref<9x1x512xf32, #tpu.memory_space<vmem>>, vector<1x1x512xf32>
    %69 = vector.shape_cast %68 : vector<1x1x512xf32> to vector<1x512xf32>
    %70 = vector.broadcast %69 : vector<1x512xf32> to vector<4x512xf32>
    %71 = arith.mulf %67, %70 : vector<4x512xf32>
    %c7_56 = arith.constant 7 : index
    %c0_57 = arith.constant 0 : index
    %c0_58 = arith.constant 0 : index
    %72 = vector.load %arg3[%c7_56, %c0_57, %c0_58] : memref<9x4x4xf32, #tpu.memory_space<vmem>>, vector<1x4x4xf32>
    %73 = vector.shape_cast %72 : vector<1x4x4xf32> to vector<4x4xf32>
    %cst_59 = arith.constant dense<0.000000e+00> : vector<4x512xf32>
    %74 = tpu.matmul %73, %71, %cst_59 {dimension_numbers = #tpu.dot_dimension_numbers<[1], [0], [0], [1], [0, 0, 1, 1], [], []>} : vector<4x4xf32>, vector<4x512xf32>, vector<4x512xf32> -> vector<4x512xf32>
    %75 = arith.addf %66, %74 : vector<4x512xf32>
    %c495_i32 = arith.constant 495 : i32
    %76 = tpu.dynamic_rotate %9 by %c495_i32 dim 1 : vector<4x512xf32>, i32 -> vector<4x512xf32>
    %c8 = arith.constant 8 : index
    %c0_60 = arith.constant 0 : index
    %c0_61 = arith.constant 0 : index
    %77 = vector.load %arg7[%c8, %c0_60, %c0_61] : memref<9x1x512xf32, #tpu.memory_space<vmem>>, vector<1x1x512xf32>
    %78 = vector.shape_cast %77 : vector<1x1x512xf32> to vector<1x512xf32>
    %79 = vector.broadcast %78 : vector<1x512xf32> to vector<4x512xf32>
    %80 = arith.mulf %76, %79 : vector<4x512xf32>
    %c8_62 = arith.constant 8 : index
    %c0_63 = arith.constant 0 : index
    %c0_64 = arith.constant 0 : index
    %81 = vector.load %arg3[%c8_62, %c0_63, %c0_64] : memref<9x4x4xf32, #tpu.memory_space<vmem>>, vector<1x4x4xf32>
    %82 = vector.shape_cast %81 : vector<1x4x4xf32> to vector<4x4xf32>
    %cst_65 = arith.constant dense<0.000000e+00> : vector<4x512xf32>
    %83 = tpu.matmul %82, %80, %cst_65 {dimension_numbers = #tpu.dot_dimension_numbers<[1], [0], [0], [1], [0, 0, 1, 1], [], []>} : vector<4x4xf32>, vector<4x512xf32>, vector<4x512xf32> -> vector<4x512xf32>
    %84 = arith.addf %75, %83 : vector<4x512xf32>
    %c0_66 = arith.constant 0 : index
    %c0_67 = arith.constant 0 : index
    %85 = vector.load %arg4[%c0_66, %c0_67] : memref<4x1xf32, #tpu.memory_space<vmem>>, vector<4x1xf32>
    %86 = vector.broadcast %85 : vector<4x1xf32> to vector<4x512xf32>
    %87 = arith.addf %84, %86 : vector<4x512xf32>
    %cst_68 = arith.constant 0.000000e+00 : f32
    %88 = vector.broadcast %cst_68 : f32 to vector<4x512xf32>
    %89 = arith.maximumf %87, %88 : vector<4x512xf32>
    %90 = arith.addf %4, %89 : vector<4x512xf32>
    %c17_i32_69 = arith.constant 17 : i32
    %91 = tpu.dynamic_rotate %90 by %c17_i32_69 dim 1 : vector<4x512xf32>, i32 -> vector<4x512xf32>
    %c0_70 = arith.constant 0 : index
    %c0_71 = arith.constant 0 : index
    %c0_72 = arith.constant 0 : index
    %92 = vector.load %arg7[%c0_70, %c0_71, %c0_72] : memref<9x1x512xf32, #tpu.memory_space<vmem>>, vector<1x1x512xf32>
    %93 = vector.shape_cast %92 : vector<1x1x512xf32> to vector<1x512xf32>
    %94 = vector.broadcast %93 : vector<1x512xf32> to vector<4x512xf32>
    %95 = arith.mulf %91, %94 : vector<4x512xf32>
    %c0_73 = arith.constant 0 : index
    %c0_74 = arith.constant 0 : index
    %c0_75 = arith.constant 0 : index
    %96 = vector.load %arg5[%c0_73, %c0_74, %c0_75] : memref<9x4x4xf32, #tpu.memory_space<vmem>>, vector<1x4x4xf32>
    %97 = vector.shape_cast %96 : vector<1x4x4xf32> to vector<4x4xf32>
    %cst_76 = arith.constant dense<0.000000e+00> : vector<4x512xf32>
    %98 = tpu.matmul %97, %95, %cst_76 {dimension_numbers = #tpu.dot_dimension_numbers<[1], [0], [0], [1], [0, 0, 1, 1], [], []>} : vector<4x4xf32>, vector<4x512xf32>, vector<4x512xf32> -> vector<4x512xf32>
    %c16_i32_77 = arith.constant 16 : i32
    %99 = tpu.dynamic_rotate %90 by %c16_i32_77 dim 1 : vector<4x512xf32>, i32 -> vector<4x512xf32>
    %c1_78 = arith.constant 1 : index
    %c0_79 = arith.constant 0 : index
    %c0_80 = arith.constant 0 : index
    %100 = vector.load %arg7[%c1_78, %c0_79, %c0_80] : memref<9x1x512xf32, #tpu.memory_space<vmem>>, vector<1x1x512xf32>
    %101 = vector.shape_cast %100 : vector<1x1x512xf32> to vector<1x512xf32>
    %102 = vector.broadcast %101 : vector<1x512xf32> to vector<4x512xf32>
    %103 = arith.mulf %99, %102 : vector<4x512xf32>
    %c1_81 = arith.constant 1 : index
    %c0_82 = arith.constant 0 : index
    %c0_83 = arith.constant 0 : index
    %104 = vector.load %arg5[%c1_81, %c0_82, %c0_83] : memref<9x4x4xf32, #tpu.memory_space<vmem>>, vector<1x4x4xf32>
    %105 = vector.shape_cast %104 : vector<1x4x4xf32> to vector<4x4xf32>
    %cst_84 = arith.constant dense<0.000000e+00> : vector<4x512xf32>
    %106 = tpu.matmul %105, %103, %cst_84 {dimension_numbers = #tpu.dot_dimension_numbers<[1], [0], [0], [1], [0, 0, 1, 1], [], []>} : vector<4x4xf32>, vector<4x512xf32>, vector<4x512xf32> -> vector<4x512xf32>
    %107 = arith.addf %98, %106 : vector<4x512xf32>
    %c15_i32_85 = arith.constant 15 : i32
    %108 = tpu.dynamic_rotate %90 by %c15_i32_85 dim 1 : vector<4x512xf32>, i32 -> vector<4x512xf32>
    %c2_86 = arith.constant 2 : index
    %c0_87 = arith.constant 0 : index
    %c0_88 = arith.constant 0 : index
    %109 = vector.load %arg7[%c2_86, %c0_87, %c0_88] : memref<9x1x512xf32, #tpu.memory_space<vmem>>, vector<1x1x512xf32>
    %110 = vector.shape_cast %109 : vector<1x1x512xf32> to vector<1x512xf32>
    %111 = vector.broadcast %110 : vector<1x512xf32> to vector<4x512xf32>
    %112 = arith.mulf %108, %111 : vector<4x512xf32>
    %c2_89 = arith.constant 2 : index
    %c0_90 = arith.constant 0 : index
    %c0_91 = arith.constant 0 : index
    %113 = vector.load %arg5[%c2_89, %c0_90, %c0_91] : memref<9x4x4xf32, #tpu.memory_space<vmem>>, vector<1x4x4xf32>
    %114 = vector.shape_cast %113 : vector<1x4x4xf32> to vector<4x4xf32>
    %cst_92 = arith.constant dense<0.000000e+00> : vector<4x512xf32>
    %115 = tpu.matmul %114, %112, %cst_92 {dimension_numbers = #tpu.dot_dimension_numbers<[1], [0], [0], [1], [0, 0, 1, 1], [], []>} : vector<4x4xf32>, vector<4x512xf32>, vector<4x512xf32> -> vector<4x512xf32>
    %116 = arith.addf %107, %115 : vector<4x512xf32>
    %c1_i32_93 = arith.constant 1 : i32
    %117 = tpu.dynamic_rotate %90 by %c1_i32_93 dim 1 : vector<4x512xf32>, i32 -> vector<4x512xf32>
    %c3_94 = arith.constant 3 : index
    %c0_95 = arith.constant 0 : index
    %c0_96 = arith.constant 0 : index
    %118 = vector.load %arg7[%c3_94, %c0_95, %c0_96] : memref<9x1x512xf32, #tpu.memory_space<vmem>>, vector<1x1x512xf32>
    %119 = vector.shape_cast %118 : vector<1x1x512xf32> to vector<1x512xf32>
    %120 = vector.broadcast %119 : vector<1x512xf32> to vector<4x512xf32>
    %121 = arith.mulf %117, %120 : vector<4x512xf32>
    %c3_97 = arith.constant 3 : index
    %c0_98 = arith.constant 0 : index
    %c0_99 = arith.constant 0 : index
    %122 = vector.load %arg5[%c3_97, %c0_98, %c0_99] : memref<9x4x4xf32, #tpu.memory_space<vmem>>, vector<1x4x4xf32>
    %123 = vector.shape_cast %122 : vector<1x4x4xf32> to vector<4x4xf32>
    %cst_100 = arith.constant dense<0.000000e+00> : vector<4x512xf32>
    %124 = tpu.matmul %123, %121, %cst_100 {dimension_numbers = #tpu.dot_dimension_numbers<[1], [0], [0], [1], [0, 0, 1, 1], [], []>} : vector<4x4xf32>, vector<4x512xf32>, vector<4x512xf32> -> vector<4x512xf32>
    %125 = arith.addf %116, %124 : vector<4x512xf32>
    %c4_101 = arith.constant 4 : index
    %c0_102 = arith.constant 0 : index
    %c0_103 = arith.constant 0 : index
    %126 = vector.load %arg5[%c4_101, %c0_102, %c0_103] : memref<9x4x4xf32, #tpu.memory_space<vmem>>, vector<1x4x4xf32>
    %127 = vector.shape_cast %126 : vector<1x4x4xf32> to vector<4x4xf32>
    %cst_104 = arith.constant dense<0.000000e+00> : vector<4x512xf32>
    %128 = tpu.matmul %127, %90, %cst_104 {dimension_numbers = #tpu.dot_dimension_numbers<[1], [0], [0], [1], [0, 0, 1, 1], [], []>} : vector<4x4xf32>, vector<4x512xf32>, vector<4x512xf32> -> vector<4x512xf32>
    %129 = arith.addf %125, %128 : vector<4x512xf32>
    %c511_i32_105 = arith.constant 511 : i32
    %130 = tpu.dynamic_rotate %90 by %c511_i32_105 dim 1 : vector<4x512xf32>, i32 -> vector<4x512xf32>
    %c5_106 = arith.constant 5 : index
    %c0_107 = arith.constant 0 : index
    %c0_108 = arith.constant 0 : index
    %131 = vector.load %arg7[%c5_106, %c0_107, %c0_108] : memref<9x1x512xf32, #tpu.memory_space<vmem>>, vector<1x1x512xf32>
    %132 = vector.shape_cast %131 : vector<1x1x512xf32> to vector<1x512xf32>
    %133 = vector.broadcast %132 : vector<1x512xf32> to vector<4x512xf32>
    %134 = arith.mulf %130, %133 : vector<4x512xf32>
    %c5_109 = arith.constant 5 : index
    %c0_110 = arith.constant 0 : index
    %c0_111 = arith.constant 0 : index
    %135 = vector.load %arg5[%c5_109, %c0_110, %c0_111] : memref<9x4x4xf32, #tpu.memory_space<vmem>>, vector<1x4x4xf32>
    %136 = vector.shape_cast %135 : vector<1x4x4xf32> to vector<4x4xf32>
    %cst_112 = arith.constant dense<0.000000e+00> : vector<4x512xf32>
    %137 = tpu.matmul %136, %134, %cst_112 {dimension_numbers = #tpu.dot_dimension_numbers<[1], [0], [0], [1], [0, 0, 1, 1], [], []>} : vector<4x4xf32>, vector<4x512xf32>, vector<4x512xf32> -> vector<4x512xf32>
    %138 = arith.addf %129, %137 : vector<4x512xf32>
    %c497_i32_113 = arith.constant 497 : i32
    %139 = tpu.dynamic_rotate %90 by %c497_i32_113 dim 1 : vector<4x512xf32>, i32 -> vector<4x512xf32>
    %c6_114 = arith.constant 6 : index
    %c0_115 = arith.constant 0 : index
    %c0_116 = arith.constant 0 : index
    %140 = vector.load %arg7[%c6_114, %c0_115, %c0_116] : memref<9x1x512xf32, #tpu.memory_space<vmem>>, vector<1x1x512xf32>
    %141 = vector.shape_cast %140 : vector<1x1x512xf32> to vector<1x512xf32>
    %142 = vector.broadcast %141 : vector<1x512xf32> to vector<4x512xf32>
    %143 = arith.mulf %139, %142 : vector<4x512xf32>
    %c6_117 = arith.constant 6 : index
    %c0_118 = arith.constant 0 : index
    %c0_119 = arith.constant 0 : index
    %144 = vector.load %arg5[%c6_117, %c0_118, %c0_119] : memref<9x4x4xf32, #tpu.memory_space<vmem>>, vector<1x4x4xf32>
    %145 = vector.shape_cast %144 : vector<1x4x4xf32> to vector<4x4xf32>
    %cst_120 = arith.constant dense<0.000000e+00> : vector<4x512xf32>
    %146 = tpu.matmul %145, %143, %cst_120 {dimension_numbers = #tpu.dot_dimension_numbers<[1], [0], [0], [1], [0, 0, 1, 1], [], []>} : vector<4x4xf32>, vector<4x512xf32>, vector<4x512xf32> -> vector<4x512xf32>
    %147 = arith.addf %138, %146 : vector<4x512xf32>
    %c496_i32_121 = arith.constant 496 : i32
    %148 = tpu.dynamic_rotate %90 by %c496_i32_121 dim 1 : vector<4x512xf32>, i32 -> vector<4x512xf32>
    %c7_122 = arith.constant 7 : index
    %c0_123 = arith.constant 0 : index
    %c0_124 = arith.constant 0 : index
    %149 = vector.load %arg7[%c7_122, %c0_123, %c0_124] : memref<9x1x512xf32, #tpu.memory_space<vmem>>, vector<1x1x512xf32>
    %150 = vector.shape_cast %149 : vector<1x1x512xf32> to vector<1x512xf32>
    %151 = vector.broadcast %150 : vector<1x512xf32> to vector<4x512xf32>
    %152 = arith.mulf %148, %151 : vector<4x512xf32>
    %c7_125 = arith.constant 7 : index
    %c0_126 = arith.constant 0 : index
    %c0_127 = arith.constant 0 : index
    %153 = vector.load %arg5[%c7_125, %c0_126, %c0_127] : memref<9x4x4xf32, #tpu.memory_space<vmem>>, vector<1x4x4xf32>
    %154 = vector.shape_cast %153 : vector<1x4x4xf32> to vector<4x4xf32>
    %cst_128 = arith.constant dense<0.000000e+00> : vector<4x512xf32>
    %155 = tpu.matmul %154, %152, %cst_128 {dimension_numbers = #tpu.dot_dimension_numbers<[1], [0], [0], [1], [0, 0, 1, 1], [], []>} : vector<4x4xf32>, vector<4x512xf32>, vector<4x512xf32> -> vector<4x512xf32>
    %156 = arith.addf %147, %155 : vector<4x512xf32>
    %c495_i32_129 = arith.constant 495 : i32
    %157 = tpu.dynamic_rotate %90 by %c495_i32_129 dim 1 : vector<4x512xf32>, i32 -> vector<4x512xf32>
    %c8_130 = arith.constant 8 : index
    %c0_131 = arith.constant 0 : index
    %c0_132 = arith.constant 0 : index
    %158 = vector.load %arg7[%c8_130, %c0_131, %c0_132] : memref<9x1x512xf32, #tpu.memory_space<vmem>>, vector<1x1x512xf32>
    %159 = vector.shape_cast %158 : vector<1x1x512xf32> to vector<1x512xf32>
    %160 = vector.broadcast %159 : vector<1x512xf32> to vector<4x512xf32>
    %161 = arith.mulf %157, %160 : vector<4x512xf32>
    %c8_133 = arith.constant 8 : index
    %c0_134 = arith.constant 0 : index
    %c0_135 = arith.constant 0 : index
    %162 = vector.load %arg5[%c8_133, %c0_134, %c0_135] : memref<9x4x4xf32, #tpu.memory_space<vmem>>, vector<1x4x4xf32>
    %163 = vector.shape_cast %162 : vector<1x4x4xf32> to vector<4x4xf32>
    %cst_136 = arith.constant dense<0.000000e+00> : vector<4x512xf32>
    %164 = tpu.matmul %163, %161, %cst_136 {dimension_numbers = #tpu.dot_dimension_numbers<[1], [0], [0], [1], [0, 0, 1, 1], [], []>} : vector<4x4xf32>, vector<4x512xf32>, vector<4x512xf32> -> vector<4x512xf32>
    %165 = arith.addf %156, %164 : vector<4x512xf32>
    %c0_137 = arith.constant 0 : index
    %c0_138 = arith.constant 0 : index
    %166 = vector.load %arg6[%c0_137, %c0_138] : memref<4x1xf32, #tpu.memory_space<vmem>>, vector<4x1xf32>
    %167 = vector.broadcast %166 : vector<4x1xf32> to vector<4x512xf32>
    %168 = arith.addf %165, %167 : vector<4x512xf32>
    %cst_139 = arith.constant 0.000000e+00 : f32
    %169 = vector.broadcast %cst_139 : f32 to vector<4x512xf32>
    %170 = arith.maximumf %168, %169 : vector<4x512xf32>
    %171 = arith.addf %9, %170 : vector<4x512xf32>
    %172 = vector.extract_strided_slice %90 {offsets = [0, 0], sizes = [4, 256], strides = [1, 1]} : vector<4x512xf32> to vector<4x256xf32>
    %c0_140 = arith.constant 0 : index
    %c0_141 = arith.constant 0 : index
    %c0_142 = arith.constant 0 : index
    %c0_143 = arith.constant 0 : index
    %173 = vector.load %arg8[%c0_140, %c0_141, %c0_142, %c0_143] : memref<2x2x4x256xf32, #tpu.memory_space<vmem>>, vector<1x1x4x256xf32>
    %174 = vector.shape_cast %173 : vector<1x1x4x256xf32> to vector<4x256xf32>
    %175 = vector.shape_cast %172 : vector<4x256xf32> to vector<1x1x4x256xf32>
    tpu.vector_store %arg8[%c0_140, %c0_141, %c0_142, %c0_143], %175 {strides = array<i32>} : memref<2x2x4x256xf32, #tpu.memory_space<vmem>>, vector<1x1x4x256xf32>,
    %176 = vector.extract_strided_slice %171 {offsets = [0, 0], sizes = [4, 256], strides = [1, 1]} : vector<4x512xf32> to vector<4x256xf32>
    %c0_144 = arith.constant 0 : index
    %c1_145 = arith.constant 1 : index
    %c0_146 = arith.constant 0 : index
    %c0_147 = arith.constant 0 : index
    %177 = vector.load %arg8[%c0_144, %c1_145, %c0_146, %c0_147] : memref<2x2x4x256xf32, #tpu.memory_space<vmem>>, vector<1x1x4x256xf32>
    %178 = vector.shape_cast %177 : vector<1x1x4x256xf32> to vector<4x256xf32>
    %179 = vector.shape_cast %176 : vector<4x256xf32> to vector<1x1x4x256xf32>
    tpu.vector_store %arg8[%c0_144, %c1_145, %c0_146, %c0_147], %179 {strides = array<i32>} : memref<2x2x4x256xf32, #tpu.memory_space<vmem>>, vector<1x1x4x256xf32>,
    %180 = vector.extract_strided_slice %90 {offsets = [0, 256], sizes = [4, 256], strides = [1, 1]} : vector<4x512xf32> to vector<4x256xf32>
    %c1_148 = arith.constant 1 : index
    %c0_149 = arith.constant 0 : index
    %c0_150 = arith.constant 0 : index
    %c0_151 = arith.constant 0 : index
    %181 = vector.load %arg8[%c1_148, %c0_149, %c0_150, %c0_151] : memref<2x2x4x256xf32, #tpu.memory_space<vmem>>, vector<1x1x4x256xf32>
    %182 = vector.shape_cast %181 : vector<1x1x4x256xf32> to vector<4x256xf32>
    %183 = vector.shape_cast %180 : vector<4x256xf32> to vector<1x1x4x256xf32>
    tpu.vector_store %arg8[%c1_148, %c0_149, %c0_150, %c0_151], %183 {strides = array<i32>} : memref<2x2x4x256xf32, #tpu.memory_space<vmem>>, vector<1x1x4x256xf32>,
    %184 = vector.extract_strided_slice %171 {offsets = [0, 256], sizes = [4, 256], strides = [1, 1]} : vector<4x512xf32> to vector<4x256xf32>
    %c1_152 = arith.constant 1 : index
    %c1_153 = arith.constant 1 : index
    %c0_154 = arith.constant 0 : index
    %c0_155 = arith.constant 0 : index
    %185 = vector.load %arg8[%c1_152, %c1_153, %c0_154, %c0_155] : memref<2x2x4x256xf32, #tpu.memory_space<vmem>>, vector<1x1x4x256xf32>
    %186 = vector.shape_cast %185 : vector<1x1x4x256xf32> to vector<4x256xf32>
    %187 = vector.shape_cast %184 : vector<4x256xf32> to vector<1x1x4x256xf32>
    tpu.vector_store %arg8[%c1_152, %c1_153, %c0_154, %c0_155], %187 {strides = array<i32>} : memref<2x2x4x256xf32, #tpu.memory_space<vmem>>, vector<1x1x4x256xf32>,
    return
  }
  func.func @transform_0(%arg0: i32) -> (i32, i32, i32, i32) {
    %c0_i32 = arith.constant 0 : i32
    %c0_i32_0 = arith.constant 0 : i32
    %c0_i32_1 = arith.constant 0 : i32
    %c0_i32_2 = arith.constant 0 : i32
    return %arg0, %c0_i32, %c0_i32_0, %c0_i32_1 : i32, i32, i32, i32
  }
  func.func @transform_1(%arg0: i32) -> (i32, i32, i32, i32) {
    %c1_i32 = arith.constant 1 : i32
    %c0_i32 = arith.constant 0 : i32
    %c0_i32_0 = arith.constant 0 : i32
    %c0_i32_1 = arith.constant 0 : i32
    return %arg0, %c1_i32, %c0_i32, %c0_i32_0 : i32, i32, i32, i32
  }
  func.func @transform_2(%arg0: i32) -> (i32, i32, i32) {
    %c0_i32 = arith.constant 0 : i32
    %c0_i32_0 = arith.constant 0 : i32
    %c0_i32_1 = arith.constant 0 : i32
    %c0_i32_2 = arith.constant 0 : i32
    return %c0_i32, %c0_i32_0, %c0_i32_1 : i32, i32, i32
  }
  func.func @transform_3(%arg0: i32) -> (i32, i32) {
    %c0_i32 = arith.constant 0 : i32
    %c0_i32_0 = arith.constant 0 : i32
    %c0_i32_1 = arith.constant 0 : i32
    return %c0_i32, %c0_i32_0 : i32, i32
  }
  func.func @transform_4(%arg0: i32) -> (i32, i32, i32) {
    %c0_i32 = arith.constant 0 : i32
    %c0_i32_0 = arith.constant 0 : i32
    %c0_i32_1 = arith.constant 0 : i32
    %c0_i32_2 = arith.constant 0 : i32
    return %c0_i32, %c0_i32_0, %c0_i32_1 : i32, i32, i32
  }
  func.func @transform_5(%arg0: i32) -> (i32, i32) {
    %c0_i32 = arith.constant 0 : i32
    %c0_i32_0 = arith.constant 0 : i32
    %c0_i32_1 = arith.constant 0 : i32
    return %c0_i32, %c0_i32_0 : i32, i32
  }
  func.func @transform_6(%arg0: i32) -> (i32, i32, i32) {
    %c0_i32 = arith.constant 0 : i32
    %c0_i32_0 = arith.constant 0 : i32
    %c0_i32_1 = arith.constant 0 : i32
    %c0_i32_2 = arith.constant 0 : i32
    return %c0_i32, %c0_i32_0, %c0_i32_1 : i32, i32, i32
  }
  func.func @transform_7(%arg0: i32) -> (i32, i32, i32, i32) {
    %c0_i32 = arith.constant 0 : i32
    %c0_i32_0 = arith.constant 0 : i32
    %c0_i32_1 = arith.constant 0 : i32
    %c0_i32_2 = arith.constant 0 : i32
    return %arg0, %c0_i32, %c0_i32_0, %c0_i32_1 : i32, i32, i32, i32
  }
}

</mosaic_0001>

<llo_original>
// kernel: _coupling_call.1
$region0: #{_coupling_call.1}
  #allocation0 [shape = 'u32[]', space=smem, size = 0x4, offset = 0x4, fixed_abs, tag = 'smem constant byte address 0x4 - core index']
  #allocation1 [shape = 'u32[72,128]{1,0:T(1,128)}', space=vmem, size = 0x9000, scoped, tag = 'internal scratch']
  %s0 = inlined_call_operand.vmem [shape: f32[4,2,4,256], index: 0, kind: input, shape index: {}, may-alias: {0,1}]
  %s1 = inlined_call_operand.vmem [shape: f32[4,2,4,256], index: 1, kind: input, shape index: {}, may-alias: {0,1}]
  %s2 = inlined_call_operand.vmem [shape: f32[9,4,4], index: 2, kind: input, shape index: {}]
  %s3 = inlined_call_operand.vmem [shape: f32[4,1], index: 3, kind: input, shape index: {}]
  %s4 = inlined_call_operand.vmem [shape: f32[9,4,4], index: 4, kind: input, shape index: {}]
  %s5 = inlined_call_operand.vmem [shape: f32[4,1], index: 5, kind: input, shape index: {}]
  %s6 = inlined_call_operand.vmem [shape: f32[9,1,512], index: 6, kind: input, shape index: {}]
  %s7 = inlined_call_operand.hbm [shape: f32[4,2,4,256], index: 7, kind: output, shape index: {}]
  %s8 = sld [smem:[#allocation0]]
  $region137: #{_coupling_call.1} parent=0
    _
  %s10 = ssub.s32 1, %s8
  %s11 = scalar_select 0, %s10, %s8
  $region1: #{_coupling_call.1} parent=0
    #allocation2 [shape = 'u8[16384]{0}', space=vmem, size = 0x4000, scoped, tag = 'input window, operand 0']
    #allocation3 [shape = 'u8[16384]{0}', space=vmem, size = 0x4000, scoped, tag = 'input window, operand 1']
    #allocation4 [shape = 'u8[32768]{0}', space=vmem, size = 0x8000, scoped, tag = 'output window, operand 0']
    #allocation5 [shape = 's32[2]{0}', space=sflag, size = 0x8, scoped, tag = 'scoped memory for _coupling_call.1']
    %12 = vsyncpa [#allocation5], 0
    %s13 = scalar_lea.sflag [#allocation5], 1
    %14 = vsyncpa %s13, 0
    loop: start=0, step=1, limit=4
    $region2: #{_coupling_call.1} parent=1 // loop_pre_header
      _
    $region3: #{_coupling_call.1} parent=1 // loop_header
      %s16 = sphi 0, %s20
      %p17 = scmp.ge.s32.totalorder %s16, 4
      %s26 = sphi 0, %s28
      %s29 = sphi 0, %s26
      %s30 = sphi 0, %s29
      %s46 = sphi 0, %s30
      %s52 = sphi 0, %s54
      %s55 = sphi 0, %s52
      %s56 = sphi 0, %s55
      %s72 = sphi 0, %s56
      %s76 = sphi 0, %s76
      %s78 = sphi 0, %s76
      %s79 = sphi 0, %s78
      %s93 = sphi 0, %s79
      %s97 = sphi 0, %s97
      %s99 = sphi 0, %s97
      %s100 = sphi 0, %s99
      %s114 = sphi 0, %s100
      %s118 = sphi 0, %s118
      %s120 = sphi 0, %s118
      %s121 = sphi 0, %s120
      %s135 = sphi 0, %s121
      %s139 = sphi 0, %s139
      %s141 = sphi 0, %s139
      %s142 = sphi 0, %s141
      %s156 = sphi 0, %s142
      %s160 = sphi 0, %s160
      %s162 = sphi 0, %s160
      %s163 = sphi 0, %s162
      %s177 = sphi 0, %s163
      %s183 = sphi 0, %s185
      %s186 = sphi 0, %s183
      %s187 = sphi 0, %s186
      %s203 = sphi 0, %s187
    $region4: #{_coupling_call.1} parent=1 // loop_header_branch
      %19 = sbr.rel (%p17) target = $region8
    $region5: #{_coupling_call.1} parent=1 // loop_body
      %s21 = ssub.s32 %s16, 1
      %s22 = ssub.s32 %s16, 2
      %s23 = sadd.s32 %s16, 1
      %s24 = ssub.s32 %s16, %s23
      %p25 = scmp.eq.s32.totalorder %s24, 0
      %s27 = sadd.s32 %s26, 1
      %s28 = scalar_select %p25, %s26, %s27
      %p31 = pneg %p25
      %p32 = scmp.eq.s32.totalorder %s16, 1
      %p33 = por %p31, %p32
      %p34 = scmp.ne.s32.totalorder %s26, %s29
      %p35 = scmp.eq.s32.totalorder %s16, 0
      %p36 = por %p34, %p35
      %p37 = scmp.ne.s32.totalorder %s26, %s29
      %p38 = scmp.eq.s32.totalorder %s21, 1
      %p39 = por %p37, %p38
      %p40 = scmp.ne.s32.totalorder %s29, %s30
      %p41 = scmp.eq.s32.totalorder %s21, 0
      %p42 = por %p40, %p41
      %p43 = scmp.ne.s32.totalorder %s29, %s30
      %p44 = scmp.eq.s32.totalorder %s22, 1
      %p45 = por %p43, %p44
      %p47 = scmp.ne.s32.totalorder %s30, %s46
      %p48 = scmp.eq.s32.totalorder %s22, 0
      %p49 = por %p47, %p48
      %s50 = ssub.s32 %s16, %s23
      %p51 = scmp.eq.s32.totalorder %s50, 0
      %s53 = sadd.s32 %s52, 1
      %s54 = scalar_select %p51, %s52, %s53
      %p57 = pneg %p51
      %p58 = scmp.eq.s32.totalorder %s16, 1
      %p59 = por %p57, %p58
      %p60 = scmp.ne.s32.totalorder %s52, %s55
      %p61 = scmp.eq.s32.totalorder %s16, 0
      %p62 = por %p60, %p61
      %p63 = scmp.ne.s32.totalorder %s52, %s55
      %p64 = scmp.eq.s32.totalorder %s21, 1
      %p65 = por %p63, %p64
      %p66 = scmp.ne.s32.totalorder %s55, %s56
      %p67 = scmp.eq.s32.totalorder %s21, 0
      %p68 = por %p66, %p67
      %p69 = scmp.ne.s32.totalorder %s55, %s56
      %p70 = scmp.eq.s32.totalorder %s22, 1
      %p71 = por %p69, %p70
      %p73 = scmp.ne.s32.totalorder %s56, %s72
      %p74 = scmp.eq.s32.totalorder %s22, 0
      %p75 = por %p73, %p74
      %s77 = sadd.s32 %s76, 1
      %p80 = scmp.eq.s32.totalorder %s16, 1
      %p81 = scmp.ne.s32.totalorder %s76, %s78
      %p82 = scmp.eq.s32.totalorder %s16, 0
      %p83 = por %p81, %p82
      %p84 = scmp.ne.s32.totalorder %s76, %s78
      %p85 = scmp.eq.s32.totalorder %s21, 1
      %p86 = por %p84, %p85
      %p87 = scmp.ne.s32.totalorder %s78, %s79
      %p88 = scmp.eq.s32.totalorder %s21, 0
      %p89 = por %p87, %p88
      %p90 = scmp.ne.s32.totalorder %s78, %s79
      %p91 = scmp.eq.s32.totalorder %s22, 1
      %p92 = por %p90, %p91
      %p94 = scmp.ne.s32.totalorder %s79, %s93
      %p95 = scmp.eq.s32.totalorder %s22, 0
      %p96 = por %p94, %p95
      %s98 = sadd.s32 %s97, 1
      %p101 = scmp.eq.s32.totalorder %s16, 1
      %p102 = scmp.ne.s32.totalorder %s97, %s99
      %p103 = scmp.eq.s32.totalorder %s16, 0
      %p104 = por %p102, %p103
      %p105 = scmp.ne.s32.totalorder %s97, %s99
      %p106 = scmp.eq.s32.totalorder %s21, 1
      %p107 = por %p105, %p106
      %p108 = scmp.ne.s32.totalorder %s99, %s100
      %p109 = scmp.eq.s32.totalorder %s21, 0
      %p110 = por %p108, %p109
      %p111 = scmp.ne.s32.totalorder %s99, %s100
      %p112 = scmp.eq.s32.totalorder %s22, 1
      %p113 = por %p111, %p112
      %p115 = scmp.ne.s32.totalorder %s100, %s114
      %p116 = scmp.eq.s32.totalorder %s22, 0
      %p117 = por %p115, %p116
      %s119 = sadd.s32 %s118, 1
      %p122 = scmp.eq.s32.totalorder %s16, 1
      %p123 = scmp.ne.s32.totalorder %s118, %s120
      %p124 = scmp.eq.s32.totalorder %s16, 0
      %p125 = por %p123, %p124
      %p126 = scmp.ne.s32.totalorder %s118, %s120
      %p127 = scmp.eq.s32.totalorder %s21, 1
      %p128 = por %p126, %p127
      %p129 = scmp.ne.s32.totalorder %s120, %s121
      %p130 = scmp.eq.s32.totalorder %s21, 0
      %p131 = por %p129, %p130
      %p132 = scmp.ne.s32.totalorder %s120, %s121
      %p133 = scmp.eq.s32.totalorder %s22, 1
      %p134 = por %p132, %p133
      %p136 = scmp.ne.s32.totalorder %s121, %s135
      %p137 = scmp.eq.s32.totalorder %s22, 0
      %p138 = por %p136, %p137
      %s140 = sadd.s32 %s139, 1
      %p143 = scmp.eq.s32.totalorder %s16, 1
      %p144 = scmp.ne.s32.totalorder %s139, %s141
      %p145 = scmp.eq.s32.totalorder %s16, 0
      %p146 = por %p144, %p145
      %p147 = scmp.ne.s32.totalorder %s139, %s141
      %p148 = scmp.eq.s32.totalorder %s21, 1
      %p149 = por %p147, %p148
      %p150 = scmp.ne.s32.totalorder %s141, %s142
      %p151 = scmp.eq.s32.totalorder %s21, 0
      %p152 = por %p150, %p151
      %p153 = scmp.ne.s32.totalorder %s141, %s142
      %p154 = scmp.eq.s32.totalorder %s22, 1
      %p155 = por %p153, %p154
      %p157 = scmp.ne.s32.totalorder %s142, %s156
      %p158 = scmp.eq.s32.totalorder %s22, 0
      %p159 = por %p157, %p158
      %s161 = sadd.s32 %s160, 1
      %p164 = scmp.eq.s32.totalorder %s16, 1
      %p165 = scmp.ne.s32.totalorder %s160, %s162
      %p166 = scmp.eq.s32.totalorder %s16, 0
      %p167 = por %p165, %p166
      %p168 = scmp.ne.s32.totalorder %s160, %s162
      %p169 = scmp.eq.s32.totalorder %s21, 1
      %p170 = por %p168, %p169
      %p171 = scmp.ne.s32.totalorder %s162, %s163
      %p172 = scmp.eq.s32.totalorder %s21, 0
      %p173 = por %p171, %p172
      %p174 = scmp.ne.s32.totalorder %s162, %s163
      %p175 = scmp.eq.s32.totalorder %s22, 1
      %p176 = por %p174, %p175
      %p178 = scmp.ne.s32.totalorder %s163, %s177
      %p179 = scmp.eq.s32.totalorder %s22, 0
      %p180 = por %p178, %p179
      %s181 = ssub.s32 %s16, %s23
      %p182 = scmp.eq.s32.totalorder %s181, 0
      %s184 = sadd.s32 %s183, 1
      %s185 = scalar_select %p182, %s183, %s184
      %p188 = pneg %p182
      %p189 = scmp.eq.s32.totalorder %s16, 1
      %p190 = por %p188, %p189
      %p191 = scmp.ne.s32.totalorder %s183, %s186
      %p192 = scmp.eq.s32.totalorder %s16, 0
      %p193 = por %p191, %p192
      %p194 = scmp.ne.s32.totalorder %s183, %s186
      %p195 = scmp.eq.s32.totalorder %s21, 1
      %p196 = por %p194, %p195
      %p197 = scmp.ne.s32.totalorder %s186, %s187
      %p198 = scmp.eq.s32.totalorder %s21, 0
      %p199 = por %p197, %p198
      %p200 = scmp.ne.s32.totalorder %s186, %s187
      %p201 = scmp.eq.s32.totalorder %s22, 1
      %p202 = por %p200, %p201
      %p204 = scmp.ne.s32.totalorder %s187, %s203
      %p205 = scmp.eq.s32.totalorder %s22, 0
      %p206 = por %p204, %p205
      %p207 = scmp.le.s32.totalorder 1, %s16
      %p208 = scmp.lt.s32.totalorder %s16, 3
      %p209 = pnand %p207, %p208
      %p210 = pneg %p209
      // Predicated region
      $region9: #{_coupling_call.1} parent=5 // pred_check
        _
      $region10: #{_coupling_call.1} parent=5 // pred_check_branch
        %212 = sbr.rel (%p209) target = $region12
      $region11: #{_coupling_call.1} parent=5 // pred_region
        %s213 = ssub.s32 %s16, 1
        // Predicated region
        $region13: #{_coupling_call.1} parent=11 // pred_check
          %p214 = pneg %p89
        $region14: #{_coupling_call.1} parent=11 // pred_check_branch
          %216 = sbr.rel (%p214) target = $region16
        $region15: #{_coupling_call.1} parent=11 // pred_region
          _
        $region16: #{_coupling_call.1} parent=11 // pred_fallthru
          _
        // Predicated region
        $region17: #{_coupling_call.1} parent=11 // pred_check
          %p217 = pneg %p110
        $region18: #{_coupling_call.1} parent=11 // pred_check_branch
          %219 = sbr.rel (%p217) target = $region20
        $region19: #{_coupling_call.1} parent=11 // pred_region
          _
        $region20: #{_coupling_call.1} parent=11 // pred_fallthru
          _
        // Predicated region
        $region21: #{_coupling_call.1} parent=11 // pred_check
          %p220 = pneg %p131
        $region22: #{_coupling_call.1} parent=11 // pred_check_branch
          %222 = sbr.rel (%p220) target = $region24
        $region23: #{_coupling_call.1} parent=11 // pred_region
          _
        $region24: #{_coupling_call.1} parent=11 // pred_fallthru
          _
        // Predicated region
        $region25: #{_coupling_call.1} parent=11 // pred_check
          %p223 = pneg %p152
        $region26: #{_coupling_call.1} parent=11 // pred_check_branch
          %225 = sbr.rel (%p223) target = $region28
        $region27: #{_coupling_call.1} parent=11 // pred_region
          _
        $region28: #{_coupling_call.1} parent=11 // pred_fallthru
          _
        // Predicated region
        $region29: #{_coupling_call.1} parent=11 // pred_check
          %p226 = pneg %p173
        $region30: #{_coupling_call.1} parent=11 // pred_check_branch
          %228 = sbr.rel (%p226) target = $region32
        $region31: #{_coupling_call.1} parent=11 // pred_region
          _
        $region32: #{_coupling_call.1} parent=11 // pred_fallthru
          _
      $region12: #{_coupling_call.1} parent=5 // pred_fallthru
        _
      %p229 = scmp.lt.s32.totalorder %s16, 2
      // Predicated region
      $region33: #{_coupling_call.1} parent=5 // pred_check
        %p230 = pneg %p229
      $region34: #{_coupling_call.1} parent=5 // pred_check_branch
        %232 = sbr.rel (%p230) target = $region36
      $region35: #{_coupling_call.1} parent=5 // pred_region
        // Predicated region
        $region37: #{_coupling_call.1} parent=35 // pred_check
          %p233 = pneg %p36
        $region38: #{_coupling_call.1} parent=35 // pred_check_branch
          %235 = sbr.rel (%p233) target = $region40
        $region39: #{_coupling_call.1} parent=35 // pred_region
          %s236 = sand.u32 %s26, 1
          %s237 = sand.u32 %s26, 1
          %s238 = smul.addr %s237, 16
          %s239 = scalar_lea.vmem [#allocation2], %s238
          %s240 = smul.u32 2, %s16
          %s241 = smul.addr %s240, 4
          %s242 = smul.addr %s241, 4
          %s243 = scalar_lea.vmem %s0, %s242
          // Predicated region
          $region41: #{_coupling_call.1} parent=39 // pred_check
            _
          $region42: #{_coupling_call.1} parent=39 // pred_check_branch
            %245 = sbr.rel (0) target = $region44
          $region43: #{_coupling_call.1} parent=39 // pred_region
            // Predicated region
            $region45: #{_coupling_call.1} parent=43 // pred_check
              _
            $region46: #{_coupling_call.1} parent=43 // pred_check_branch
              %247 = sbr.rel (0) target = $region48
            $region47: #{_coupling_call.1} parent=43 // pred_region
              // Predicated region
              $region60: #{_coupling_call.1} parent=47 // pred_check
                _
              $region61: #{_coupling_call.1} parent=47 // pred_check_branch
                %265 = sbr.rel (0) target = $region63
              $region62: #{_coupling_call.1} parent=47 // pred_region
                loop: start=0, step=1, limit=1
                $region64: #{_coupling_call.1} parent=62 // loop_pre_header
                  _
                $region65: #{_coupling_call.1} parent=62 // loop_header
                  %s267 = sphi 0, %s271
                  %p268 = scmp.ge.s32.totalorder %s267, 1
                  %s272 = sphi %s243, %s243
                  %s273 = sphi %s239, %s239
                $region66: #{_coupling_call.1} parent=62 // loop_header_branch
                  %270 = sbr.rel (%p268) target = $region70
                $region67: #{_coupling_call.1} parent=62 // loop_body
                  %v274 = vld [vmem:[%s272] sm:$0xff]
                  %275 = vst [vmem:[%s273] sm:$0xff] %v274
                  %v276 = vld [vmem:[%s272 + $0x10] sm:$0xff]
                  %277 = vst [vmem:[%s273 + $0x8] sm:$0xff] %v276
                $region68: #{_coupling_call.1} parent=62 // loop_footer
                  %s271 = sadd.s32 1, %s267
                $region69: #{_coupling_call.1} parent=62 // loop_footer_branch
                  %266 = sbr.rel target = $region65
                $region70: #{_coupling_call.1} parent=62 // loop_exit
                  _
              $region63: #{_coupling_call.1} parent=47 // pred_fallthru
                _
              // Predicated region
              $region71: #{_coupling_call.1} parent=47 // pred_check
                _
              $region72: #{_coupling_call.1} parent=47 // pred_check_branch
                %279 = sbr.rel target = $region74
              $region73: #{_coupling_call.1} parent=47 // pred_region
                _
              $region74: #{_coupling_call.1} parent=47 // pred_fallthru
                _
            $region48: #{_coupling_call.1} parent=43 // pred_fallthru
              _
            // Predicated region
            $region49: #{_coupling_call.1} parent=43 // pred_check
              _
            $region50: #{_coupling_call.1} parent=43 // pred_check_branch
              %249 = sbr.rel target = $region52
            $region51: #{_coupling_call.1} parent=43 // pred_region
              %s251 = ssub.s32 256, 1
              loop: start=0, step=1, limit=1
              $region53: #{_coupling_call.1} parent=51 // loop_pre_header
                _
              $region54: #{_coupling_call.1} parent=51 // loop_header
                %s253 = sphi 0, %s257
                %p254 = scmp.ge.s32.totalorder %s253, 1
                %s258 = sphi %s243, %s243
                %s259 = sphi %s239, %s239
              $region55: #{_coupling_call.1} parent=51 // loop_header_branch
                %256 = sbr.rel (%p254) target = $region59
              $region56: #{_coupling_call.1} parent=51 // loop_body
                %v260 = vld [vmem:[%s258] sm:%s251]
                %261 = vst [vmem:[%s259] sm:%s251] %v260
                %v262 = vld [vmem:[%s258 + $0x10] sm:%s251]
                %263 = vst [vmem:[%s259 + $0x8] sm:%s251] %v262
              $region57: #{_coupling_call.1} parent=51 // loop_footer
                %s257 = sadd.s32 1, %s253
              $region58: #{_coupling_call.1} parent=51 // loop_footer_branch
                %252 = sbr.rel target = $region54
              $region59: #{_coupling_call.1} parent=51 // loop_exit
                _
            $region52: #{_coupling_call.1} parent=43 // pred_fallthru
              _
          $region44: #{_coupling_call.1} parent=39 // pred_fallthru
            _
          %280 = vnop
        $region40: #{_coupling_call.1} parent=35 // pred_fallthru
          _
        // Predicated region
        $region75: #{_coupling_call.1} parent=35 // pred_check
          %p281 = pneg %p62
        $region76: #{_coupling_call.1} parent=35 // pred_check_branch
          %283 = sbr.rel (%p281) target = $region78
        $region77: #{_coupling_call.1} parent=35 // pred_region
          %s284 = sand.u32 %s52, 1
          %s285 = sand.u32 %s52, 1
          %s286 = smul.addr %s285, 16
          %s287 = scalar_lea.vmem [#allocation3], %s286
          %s288 = smul.u32 2, %s16
          %s289 = smul.addr %s288, 4
          %s290 = sadd.s32 2, %s289
          %s291 = smul.addr %s290, 4
          %s292 = scalar_lea.vmem %s1, %s291
          // Predicated region
          $region79: #{_coupling_call.1} parent=77 // pred_check
            _
          $region80: #{_coupling_call.1} parent=77 // pred_check_branch
            %294 = sbr.rel (0) target = $region82
          $region81: #{_coupling_call.1} parent=77 // pred_region
            // Predicated region
            $region83: #{_coupling_call.1} parent=81 // pred_check
              _
            $region84: #{_coupling_call.1} parent=81 // pred_check_branch
              %296 = sbr.rel (0) target = $region86
            $region85: #{_coupling_call.1} parent=81 // pred_region
              // Predicated region
              $region98: #{_coupling_call.1} parent=85 // pred_check
                _
              $region99: #{_coupling_call.1} parent=85 // pred_check_branch
                %314 = sbr.rel (0) target = $region101
              $region100: #{_coupling_call.1} parent=85 // pred_region
                loop: start=0, step=1, limit=1
                $region102: #{_coupling_call.1} parent=100 // loop_pre_header
                  _
                $region103: #{_coupling_call.1} parent=100 // loop_header
                  %s316 = sphi 0, %s320
                  %p317 = scmp.ge.s32.totalorder %s316, 1
                  %s321 = sphi %s292, %s292
                  %s322 = sphi %s287, %s287
                $region104: #{_coupling_call.1} parent=100 // loop_header_branch
                  %319 = sbr.rel (%p317) target = $region108
                $region105: #{_coupling_call.1} parent=100 // loop_body
                  %v323 = vld [vmem:[%s321] sm:$0xff]
                  %324 = vst [vmem:[%s322] sm:$0xff] %v323
                  %v325 = vld [vmem:[%s321 + $0x10] sm:$0xff]
                  %326 = vst [vmem:[%s322 + $0x8] sm:$0xff] %v325
                $region106: #{_coupling_call.1} parent=100 // loop_footer
                  %s320 = sadd.s32 1, %s316
                $region107: #{_coupling_call.1} parent=100 // loop_footer_branch
                  %315 = sbr.rel target = $region103
                $region108: #{_coupling_call.1} parent=100 // loop_exit
                  _
              $region101: #{_coupling_call.1} parent=85 // pred_fallthru
                _
              // Predicated region
              $region109: #{_coupling_call.1} parent=85 // pred_check
                _
              $region110: #{_coupling_call.1} parent=85 // pred_check_branch
                %328 = sbr.rel target = $region112
              $region111: #{_coupling_call.1} parent=85 // pred_region
                _
              $region112: #{_coupling_call.1} parent=85 // pred_fallthru
                _
            $region86: #{_coupling_call.1} parent=81 // pred_fallthru
              _
            // Predicated region
            $region87: #{_coupling_call.1} parent=81 // pred_check
              _
            $region88: #{_coupling_call.1} parent=81 // pred_check_branch
              %298 = sbr.rel target = $region90
            $region89: #{_coupling_call.1} parent=81 // pred_region
              %s300 = ssub.s32 256, 1
              loop: start=0, step=1, limit=1
              $region91: #{_coupling_call.1} parent=89 // loop_pre_header
                _
              $region92: #{_coupling_call.1} parent=89 // loop_header
                %s302 = sphi 0, %s306
                %p303 = scmp.ge.s32.totalorder %s302, 1
                %s307 = sphi %s292, %s292
                %s308 = sphi %s287, %s287
              $region93: #{_coupling_call.1} parent=89 // loop_header_branch
                %305 = sbr.rel (%p303) target = $region97
              $region94: #{_coupling_call.1} parent=89 // loop_body
                %v309 = vld [vmem:[%s307] sm:%s300]
                %310 = vst [vmem:[%s308] sm:%s300] %v309
                %v311 = vld [vmem:[%s307 + $0x10] sm:%s300]
                %312 = vst [vmem:[%s308 + $0x8] sm:%s300] %v311
              $region95: #{_coupling_call.1} parent=89 // loop_footer
                %s306 = sadd.s32 1, %s302
              $region96: #{_coupling_call.1} parent=89 // loop_footer_branch
                %301 = sbr.rel target = $region92
              $region97: #{_coupling_call.1} parent=89 // loop_exit
                _
            $region90: #{_coupling_call.1} parent=81 // pred_fallthru
              _
          $region82: #{_coupling_call.1} parent=77 // pred_fallthru
            _
          %329 = vnop
        $region78: #{_coupling_call.1} parent=35 // pred_fallthru
          _
      $region36: #{_coupling_call.1} parent=5 // pred_fallthru
        _
      %p330 = scmp.le.s32.totalorder 1, %s16
      %p331 = scmp.lt.s32.totalorder %s16, 3
      %p332 = pnand %p330, %p331
      %p333 = pneg %p332
      // Predicated region
      $region113: #{_coupling_call.1} parent=5 // pred_check
        _
      $region114: #{_coupling_call.1} parent=5 // pred_check_branch
        %335 = sbr.rel (%p332) target = $region116
      $region115: #{_coupling_call.1} parent=5 // pred_region
        %s336 = ssub.s32 %s16, 1
        %s337 = sand.u32 %s29, 1
        %s338 = sand.u32 %s29, 1
        %s339 = smul.addr %s338, 16
        %s340 = scalar_lea.vmem [#allocation2], %s339
        // Predicated region
        $region117: #{_coupling_call.1} parent=115 // pred_check
          %p341 = pneg %p42
        $region118: #{_coupling_call.1} parent=115 // pred_check_branch
          %343 = sbr.rel (%p341) target = $region120
        $region119: #{_coupling_call.1} parent=115 // pred_region
          _
        $region120: #{_coupling_call.1} parent=115 // pred_fallthru
          _
        %s344 = sand.u32 %s55, 1
        %s345 = sand.u32 %s55, 1
        %s346 = smul.addr %s345, 16
        %s347 = scalar_lea.vmem [#allocation3], %s346
        // Predicated region
        $region121: #{_coupling_call.1} parent=115 // pred_check
          %p348 = pneg %p68
        $region122: #{_coupling_call.1} parent=115 // pred_check_branch
          %350 = sbr.rel (%p348) target = $region124
        $region123: #{_coupling_call.1} parent=115 // pred_region
          _
        $region124: #{_coupling_call.1} parent=115 // pred_fallthru
          _
        %s351 = sand.u32 %s29, 1
        %s352 = sand.u32 %s29, 1
        %s353 = smul.addr %s352, 16
        %s354 = scalar_lea.vmem [#allocation2], %s353
        %p355 = pneg %p42
        %p356 = pneg %p39
        %s357 = sand.u32 %s55, 1
        %s358 = sand.u32 %s55, 1
        %s359 = smul.addr %s358, 16
        %s360 = scalar_lea.vmem [#allocation3], %s359
        %p361 = pneg %p68
        %p362 = pneg %p65
        %p363 = pneg %p89
        %p364 = pneg %p86
        %p365 = pneg %p110
        %p366 = pneg %p107
        %p367 = pneg %p131
        %p368 = pneg %p128
        %p369 = pneg %p152
        %p370 = pneg %p149
        %p371 = pneg %p173
        %p372 = pneg %p170
        %p373 = pneg %p199
        %p374 = pneg %p196
        %s375 = sand.u32 %s186, 1
        %s376 = scalar_lea.sflag [#allocation5], %s375
        %s377 = sand.u32 %s186, 1
        %s378 = smul.addr %s377, 32
        %s379 = scalar_lea.vmem [#allocation4], %s378
        %s380 = smul.u32 2, %s21
        %s381 = smul.u32 2, %s21
        %s382 = smul.u32 2, %s21
        %v383 = vld [vmem:[%s340] sm:$0xff]
        %s384 = scalar_lea.vmem %s340, 8 [#allocation2]
        %v385 = vld [vmem:[%s384] sm:$0xff]
        %387 = vst [vmem:[#allocation1] ss:$2 sm:$0xff] %v383
        %v388 = vld.sshfl [vmem:[#allocation1] sm:$0xff pattern:$0x75316420]
        %v389 = vld.sshfl [vmem:[#allocation1 + $0x8] sm:$0xff pattern:$0x75316420]
        %393 = vst [vmem:[#allocation1] ss:$2 sm:$0xff] %v385
        %v394 = vld.sshfl [vmem:[#allocation1] sm:$0xff pattern:$0x75316420]
        %v395 = vld.sshfl [vmem:[#allocation1 + $0x8] sm:$0xff pattern:$0x75316420]
        %v398 = vld [vmem:[%s347] sm:$0xff]
        %s399 = scalar_lea.vmem %s347, 8 [#allocation3]
        %v400 = vld [vmem:[%s399] sm:$0xff]
        %402 = vst [vmem:[#allocation1] ss:$2 sm:$0xff] %v398
        %v403 = vld.sshfl [vmem:[#allocation1] sm:$0xff pattern:$0x75316420]
        %v404 = vld.sshfl [vmem:[#allocation1 + $0x8] sm:$0xff pattern:$0x75316420]
        %408 = vst [vmem:[#allocation1] ss:$2 sm:$0xff] %v400
        %v409 = vld.sshfl [vmem:[#allocation1] sm:$0xff pattern:$0x75316420]
        %v410 = vld.sshfl [vmem:[#allocation1 + $0x8] sm:$0xff pattern:$0x75316420]
        %413 = vrot.lane.b32.xlu0 %v403, 17
        %v414 = vpop.permute.xlu0 %413
        %415 = vrot.lane.b32.xlu0 %v404, 17
        %v416 = vpop.permute.xlu0 %415
        %417 = vrot.lane.b32.xlu0 %v409, 17
        %v418 = vpop.permute.xlu0 %417
        %419 = vrot.lane.b32.xlu0 %v410, 17
        %v420 = vpop.permute.xlu0 %419
        %v421 = vlaneseq
        %v422 = vand.u32 %v421, 127
        %vm423 = vcmp.lt.s32.totalorder %v422, 17
        %v424 = vsel %vm423, %v418, %v420
        %v425 = vsel %vm423, %v416, %v418
        %v426 = vsel %vm423, %v414, %v416
        %v427 = vsel %vm423, %v420, %v414
        %v428 = vld [vmem:[%s6] sm:$0xf]
        %v430 = vperm.slane %v428, 0
        %v431 = vperm.slane %v428, 1
        %v432 = vperm.slane %v428, 2
        %v433 = vperm.slane %v428, 3
        %v438 = vmul.f32 %v427, %v430
        %v439 = vmul.f32 %v426, %v431
        %v440 = vmul.f32 %v425, %v432
        %v441 = vmul.f32 %v424, %v433
        %v442 = vld [vmem:[%s2] sm:$0xf]
        %443 = vrot.lane.b32.xlu0 %v403, 16
        %v444 = vpop.permute.xlu0 %443
        %445 = vrot.lane.b32.xlu0 %v404, 16
        %v446 = vpop.permute.xlu0 %445
        %447 = vrot.lane.b32.xlu0 %v409, 16
        %v448 = vpop.permute.xlu0 %447
        %449 = vrot.lane.b32.xlu0 %v410, 16
        %v450 = vpop.permute.xlu0 %449
        %vm451 = vcmp.lt.s32.totalorder %v422, 16
        %v452 = vsel %vm451, %v448, %v450
        %v453 = vsel %vm451, %v446, %v448
        %v454 = vsel %vm451, %v444, %v446
        %v455 = vsel %vm451, %v450, %v444
        %s456 = scalar_lea.vmem %s6, 4
        %v457 = vld [vmem:[%s456] sm:$0xf]
        %v459 = vperm.slane %v457, 0
        %v460 = vperm.slane %v457, 1
        %v461 = vperm.slane %v457, 2
        %v462 = vperm.slane %v457, 3
        %v467 = vmul.f32 %v455, %v459
        %v468 = vmul.f32 %v454, %v460
        %v469 = vmul.f32 %v453, %v461
        %v470 = vmul.f32 %v452, %v462
        %s471 = scalar_lea.vmem %s2, 4
        %v472 = vld [vmem:[%s471] sm:$0xf]
        %vm473 = vcmask 31744
        %v475 = vsel %vm473, %v472, 0
        %vm477 = vcmask 1043456
        %v479 = vsel %vm477, %v467, 0
        %v482 = vsel %vm477, %v468, 0
        %v485 = vsel %vm477, %v469, 0
        %v488 = vsel %vm477, %v470, 0
        %490 = vmatpush.msra.mxu0 0.0
        %491 = vmatpush.msra.mxu0 0.0
        %492 = vmatpush.msra.mxu0 0.0
        %493 = vmatpush.msra.mxu0 0.0
        %494 = vmatpush.msra.mxu0 0.0
        %495 = vmatpush.msra.mxu0 0.0
        %496 = vmatpush.msra.mxu0 0.0
        %497 = vmatpush.msra.mxu0 0.0
        %498 = vmatpush.msra.mxu0 0.0
        %499 = vmatpush.msra.mxu0 0.0
        %500 = vmatpush.msra.mxu0 0.0
        %501 = vmatpush.msra.mxu0 0.0
        %502 = vmatpush.msra.mxu0 0.0
        %503 = vmatpush.msra.mxu0 0.0
        %504 = vmatpush.msra.mxu0 0.0
        %505 = vmatpush.msra.mxu0 %v479
        %506 = vmatmul.f32.gmra.mxu0 %v475
        %v507 = vpop.f32.mrf.mxu0
        %v508 = vadd.f32 0.0, %v507
        %509 = vdwg.mxu0
        %510 = vmatpush.msra.mxu0 0.0
        %511 = vmatpush.msra.mxu0 0.0
        %512 = vmatpush.msra.mxu0 0.0
        %513 = vmatpush.msra.mxu0 0.0
        %514 = vmatpush.msra.mxu0 0.0
        %515 = vmatpush.msra.mxu0 0.0
        %516 = vmatpush.msra.mxu0 0.0
        %517 = vmatpush.msra.mxu0 0.0
        %518 = vmatpush.msra.mxu0 0.0
        %519 = vmatpush.msra.mxu0 0.0
        %520 = vmatpush.msra.mxu0 0.0
        %521 = vmatpush.msra.mxu0 0.0
        %522 = vmatpush.msra.mxu0 0.0
        %523 = vmatpush.msra.mxu0 0.0
        %524 = vmatpush.msra.mxu0 0.0
        %525 = vmatpush.msra.mxu0 %v482
        %526 = vmatmul.f32.gmra.mxu0 %v475
        %v527 = vpop.f32.mrf.mxu0
        %v528 = vadd.f32 0.0, %v527
        %529 = vdwg.mxu0
        %530 = vmatpush.msra.mxu0 0.0
        %531 = vmatpush.msra.mxu0 0.0
        %532 = vmatpush.msra.mxu0 0.0
        %533 = vmatpush.msra.mxu0 0.0
        %534 = vmatpush.msra.mxu0 0.0
        %535 = vmatpush.msra.mxu0 0.0
        %536 = vmatpush.msra.mxu0 0.0
        %537 = vmatpush.msra.mxu0 0.0
        %538 = vmatpush.msra.mxu0 0.0
        %539 = vmatpush.msra.mxu0 0.0
        %540 = vmatpush.msra.mxu0 0.0
        %541 = vmatpush.msra.mxu0 0.0
        %542 = vmatpush.msra.mxu0 0.0
        %543 = vmatpush.msra.mxu0 0.0
        %544 = vmatpush.msra.mxu0 0.0
        %545 = vmatpush.msra.mxu0 %v485
        %546 = vmatmul.f32.gmra.mxu0 %v475
        %v547 = vpop.f32.mrf.mxu0
        %v548 = vadd.f32 0.0, %v547
        %549 = vdwg.mxu0
        %550 = vmatpush.msra.mxu0 0.0
        %551 = vmatpush.msra.mxu0 0.0
        %552 = vmatpush.msra.mxu0 0.0
        %553 = vmatpush.msra.mxu0 0.0
        %554 = vmatpush.msra.mxu0 0.0
        %555 = vmatpush.msra.mxu0 0.0
        %556 = vmatpush.msra.mxu0 0.0
        %557 = vmatpush.msra.mxu0 0.0
        %558 = vmatpush.msra.mxu0 0.0
        %559 = vmatpush.msra.mxu0 0.0
        %560 = vmatpush.msra.mxu0 0.0
        %561 = vmatpush.msra.mxu0 0.0
        %562 = vmatpush.msra.mxu0 0.0
        %563 = vmatpush.msra.mxu0 0.0
        %564 = vmatpush.msra.mxu0 0.0
        %565 = vmatpush.msra.mxu0 %v488
        %566 = vmatmul.f32.gmra.mxu0 %v475
        %v567 = vpop.f32.mrf.mxu0
        %v568 = vadd.f32 0.0, %v567
        %569 = vdwg.mxu0
        %v571 = vsel %vm473, %v442, 0
        %v574 = vsel %vm477, %v438, 0
        %v577 = vsel %vm477, %v439, 0
        %v580 = vsel %vm477, %v440, 0
        %v583 = vsel %vm477, %v441, 0
        %585 = vmatpush.msra.mxu0 0.0
        %586 = vmatpush.msra.mxu0 0.0
        %587 = vmatpush.msra.mxu0 0.0
        %588 = vmatpush.msra.mxu0 0.0
        %589 = vmatpush.msra.mxu0 0.0
        %590 = vmatpush.msra.mxu0 0.0
        %591 = vmatpush.msra.mxu0 0.0
        %592 = vmatpush.msra.mxu0 0.0
        %593 = vmatpush.msra.mxu0 0.0
        %594 = vmatpush.msra.mxu0 0.0
        %595 = vmatpush.msra.mxu0 0.0
        %596 = vmatpush.msra.mxu0 0.0
        %597 = vmatpush.msra.mxu0 0.0
        %598 = vmatpush.msra.mxu0 0.0
        %599 = vmatpush.msra.mxu0 0.0
        %600 = vmatpush.msra.mxu0 %v574
        %601 = vmatmul.f32.gmra.mxu0 %v571
        %v602 = vpop.f32.mrf.mxu0
        %v603 = vadd.f32 %v508, %v602
        %604 = vdwg.mxu0
        %605 = vmatpush.msra.mxu0 0.0
        %606 = vmatpush.msra.mxu0 0.0
        %607 = vmatpush.msra.mxu0 0.0
        %608 = vmatpush.msra.mxu0 0.0
        %609 = vmatpush.msra.mxu0 0.0
        %610 = vmatpush.msra.mxu0 0.0
        %611 = vmatpush.msra.mxu0 0.0
        %612 = vmatpush.msra.mxu0 0.0
        %613 = vmatpush.msra.mxu0 0.0
        %614 = vmatpush.msra.mxu0 0.0
        %615 = vmatpush.msra.mxu0 0.0
        %616 = vmatpush.msra.mxu0 0.0
        %617 = vmatpush.msra.mxu0 0.0
        %618 = vmatpush.msra.mxu0 0.0
        %619 = vmatpush.msra.mxu0 0.0
        %620 = vmatpush.msra.mxu0 %v577
        %621 = vmatmul.f32.gmra.mxu0 %v571
        %v622 = vpop.f32.mrf.mxu0
        %v623 = vadd.f32 %v528, %v622
        %624 = vdwg.mxu0
        %625 = vmatpush.msra.mxu0 0.0
        %626 = vmatpush.msra.mxu0 0.0
        %627 = vmatpush.msra.mxu0 0.0
        %628 = vmatpush.msra.mxu0 0.0
        %629 = vmatpush.msra.mxu0 0.0
        %630 = vmatpush.msra.mxu0 0.0
        %631 = vmatpush.msra.mxu0 0.0
        %632 = vmatpush.msra.mxu0 0.0
        %633 = vmatpush.msra.mxu0 0.0
        %634 = vmatpush.msra.mxu0 0.0
        %635 = vmatpush.msra.mxu0 0.0
        %636 = vmatpush.msra.mxu0 0.0
        %637 = vmatpush.msra.mxu0 0.0
        %638 = vmatpush.msra.mxu0 0.0
        %639 = vmatpush.msra.mxu0 0.0
        %640 = vmatpush.msra.mxu0 %v580
        %641 = vmatmul.f32.gmra.mxu0 %v571
        %v642 = vpop.f32.mrf.mxu0
        %v643 = vadd.f32 %v548, %v642
        %644 = vdwg.mxu0
        %645 = vmatpush.msra.mxu0 0.0
        %646 = vmatpush.msra.mxu0 0.0
        %647 = vmatpush.msra.mxu0 0.0
        %648 = vmatpush.msra.mxu0 0.0
        %649 = vmatpush.msra.mxu0 0.0
        %650 = vmatpush.msra.mxu0 0.0
        %651 = vmatpush.msra.mxu0 0.0
        %652 = vmatpush.msra.mxu0 0.0
        %653 = vmatpush.msra.mxu0 0.0
        %654 = vmatpush.msra.mxu0 0.0
        %655 = vmatpush.msra.mxu0 0.0
        %656 = vmatpush.msra.mxu0 0.0
        %657 = vmatpush.msra.mxu0 0.0
        %658 = vmatpush.msra.mxu0 0.0
        %659 = vmatpush.msra.mxu0 0.0
        %660 = vmatpush.msra.mxu0 %v583
        %661 = vmatmul.f32.gmra.mxu0 %v571
        %v662 = vpop.f32.mrf.mxu0
        %v663 = vadd.f32 %v568, %v662
        %664 = vdwg.mxu0
        %665 = vrot.lane.b32.xlu0 %v403, 15
        %v666 = vpop.permute.xlu0 %665
        %667 = vrot.lane.b32.xlu0 %v404, 15
        %v668 = vpop.permute.xlu0 %667
        %669 = vrot.lane.b32.xlu0 %v409, 15
        %v670 = vpop.permute.xlu0 %669
        %671 = vrot.lane.b32.xlu0 %v410, 15
        %v672 = vpop.permute.xlu0 %671
        %vm673 = vcmp.lt.s32.totalorder %v422, 15
        %v674 = vsel %vm673, %v670, %v672
        %v675 = vsel %vm673, %v668, %v670
        %v676 = vsel %vm673, %v666, %v668
        %v677 = vsel %vm673, %v672, %v666
        %s678 = scalar_lea.vmem %s6, 8
        %v679 = vld [vmem:[%s678] sm:$0xf]
        %v681 = vperm.slane %v679, 0
        %v682 = vperm.slane %v679, 1
        %v683 = vperm.slane %v679, 2
        %v684 = vperm.slane %v679, 3
        %v689 = vmul.f32 %v677, %v681
        %v690 = vmul.f32 %v676, %v682
        %v691 = vmul.f32 %v675, %v683
        %v692 = vmul.f32 %v674, %v684
        %s693 = scalar_lea.vmem %s2, 8
        %v694 = vld [vmem:[%s693] sm:$0xf]
        %v696 = vsel %vm473, %v694, 0
        %v699 = vsel %vm477, %v689, 0
        %v702 = vsel %vm477, %v690, 0
        %v705 = vsel %vm477, %v691, 0
        %v708 = vsel %vm477, %v692, 0
        %710 = vmatpush.msra.mxu0 0.0
        %711 = vmatpush.msra.mxu0 0.0
        %712 = vmatpush.msra.mxu0 0.0
        %713 = vmatpush.msra.mxu0 0.0
        %714 = vmatpush.msra.mxu0 0.0
        %715 = vmatpush.msra.mxu0 0.0
        %716 = vmatpush.msra.mxu0 0.0
        %717 = vmatpush.msra.mxu0 0.0
        %718 = vmatpush.msra.mxu0 0.0
        %719 = vmatpush.msra.mxu0 0.0
        %720 = vmatpush.msra.mxu0 0.0
        %721 = vmatpush.msra.mxu0 0.0
        %722 = vmatpush.msra.mxu0 0.0
        %723 = vmatpush.msra.mxu0 0.0
        %724 = vmatpush.msra.mxu0 0.0
        %725 = vmatpush.msra.mxu0 %v699
        %726 = vmatmul.f32.gmra.mxu0 %v696
        %v727 = vpop.f32.mrf.mxu0
        %v728 = vadd.f32 0.0, %v727
        %729 = vdwg.mxu0
        %730 = vmatpush.msra.mxu0 0.0
        %731 = vmatpush.msra.mxu0 0.0
        %732 = vmatpush.msra.mxu0 0.0
        %733 = vmatpush.msra.mxu0 0.0
        %734 = vmatpush.msra.mxu0 0.0
        %735 = vmatpush.msra.mxu0 0.0
        %736 = vmatpush.msra.mxu0 0.0
        %737 = vmatpush.msra.mxu0 0.0
        %738 = vmatpush.msra.mxu0 0.0
        %739 = vmatpush.msra.mxu0 0.0
        %740 = vmatpush.msra.mxu0 0.0
        %741 = vmatpush.msra.mxu0 0.0
        %742 = vmatpush.msra.mxu0 0.0
        %743 = vmatpush.msra.mxu0 0.0
        %744 = vmatpush.msra.mxu0 0.0
        %745 = vmatpush.msra.mxu0 %v702
        %746 = vmatmul.f32.gmra.mxu0 %v696
        %v747 = vpop.f32.mrf.mxu0
        %v748 = vadd.f32 0.0, %v747
        %749 = vdwg.mxu0
        %750 = vmatpush.msra.mxu0 0.0
        %751 = vmatpush.msra.mxu0 0.0
        %752 = vmatpush.msra.mxu0 0.0
        %753 = vmatpush.msra.mxu0 0.0
        %754 = vmatpush.msra.mxu0 0.0
        %755 = vmatpush.msra.mxu0 0.0
        %756 = vmatpush.msra.mxu0 0.0
        %757 = vmatpush.msra.mxu0 0.0
        %758 = vmatpush.msra.mxu0 0.0
        %759 = vmatpush.msra.mxu0 0.0
        %760 = vmatpush.msra.mxu0 0.0
        %761 = vmatpush.msra.mxu0 0.0
        %762 = vmatpush.msra.mxu0 0.0
        %763 = vmatpush.msra.mxu0 0.0
        %764 = vmatpush.msra.mxu0 0.0
        %765 = vmatpush.msra.mxu0 %v705
        %766 = vmatmul.f32.gmra.mxu0 %v696
        %v767 = vpop.f32.mrf.mxu0
        %v768 = vadd.f32 0.0, %v767
        %769 = vdwg.mxu0
        %770 = vmatpush.msra.mxu0 0.0
        %771 = vmatpush.msra.mxu0 0.0
        %772 = vmatpush.msra.mxu0 0.0
        %773 = vmatpush.msra.mxu0 0.0
        %774 = vmatpush.msra.mxu0 0.0
        %775 = vmatpush.msra.mxu0 0.0
        %776 = vmatpush.msra.mxu0 0.0
        %777 = vmatpush.msra.mxu0 0.0
        %778 = vmatpush.msra.mxu0 0.0
        %779 = vmatpush.msra.mxu0 0.0
        %780 = vmatpush.msra.mxu0 0.0
        %781 = vmatpush.msra.mxu0 0.0
        %782 = vmatpush.msra.mxu0 0.0
        %783 = vmatpush.msra.mxu0 0.0
        %784 = vmatpush.msra.mxu0 0.0
        %785 = vmatpush.msra.mxu0 %v708
        %786 = vmatmul.f32.gmra.mxu0 %v696
        %v787 = vpop.f32.mrf.mxu0
        %v788 = vadd.f32 0.0, %v787
        %789 = vdwg.mxu0
        %v790 = vadd.f32 %v603, %v728
        %v791 = vadd.f32 %v623, %v748
        %v792 = vadd.f32 %v643, %v768
        %v793 = vadd.f32 %v663, %v788
        %794 = vrot.lane.b32.xlu0 %v403, 1
        %v795 = vpop.permute.xlu0 %794
        %796 = vrot.lane.b32.xlu0 %v404, 1
        %v797 = vpop.permute.xlu0 %796
        %798 = vrot.lane.b32.xlu0 %v409, 1
        %v799 = vpop.permute.xlu0 %798
        %800 = vrot.lane.b32.xlu0 %v410, 1
        %v801 = vpop.permute.xlu0 %800
        %vm802 = vcmp.lt.s32.totalorder %v422, 1
        %v803 = vsel %vm802, %v799, %v801
        %v804 = vsel %vm802, %v797, %v799
        %v805 = vsel %vm802, %v795, %v797
        %v806 = vsel %vm802, %v801, %v795
        %s807 = scalar_lea.vmem %s6, 12
        %v808 = vld [vmem:[%s807] sm:$0xf]
        %v810 = vperm.slane %v808, 0
        %v811 = vperm.slane %v808, 1
        %v812 = vperm.slane %v808, 2
        %v813 = vperm.slane %v808, 3
        %v818 = vmul.f32 %v806, %v810
        %v819 = vmul.f32 %v805, %v811
        %v820 = vmul.f32 %v804, %v812
        %v821 = vmul.f32 %v803, %v813
        %s822 = scalar_lea.vmem %s2, 12
        %v823 = vld [vmem:[%s822] sm:$0xf]
        %v825 = vsel %vm473, %v823, 0
        %v828 = vsel %vm477, %v818, 0
        %v831 = vsel %vm477, %v819, 0
        %v834 = vsel %vm477, %v820, 0
        %v837 = vsel %vm477, %v821, 0
        %839 = vmatpush.msra.mxu0 0.0
        %840 = vmatpush.msra.mxu0 0.0
        %841 = vmatpush.msra.mxu0 0.0
        %842 = vmatpush.msra.mxu0 0.0
        %843 = vmatpush.msra.mxu0 0.0
        %844 = vmatpush.msra.mxu0 0.0
        %845 = vmatpush.msra.mxu0 0.0
        %846 = vmatpush.msra.mxu0 0.0
        %847 = vmatpush.msra.mxu0 0.0
        %848 = vmatpush.msra.mxu0 0.0
        %849 = vmatpush.msra.mxu0 0.0
        %850 = vmatpush.msra.mxu0 0.0
        %851 = vmatpush.msra.mxu0 0.0
        %852 = vmatpush.msra.mxu0 0.0
        %853 = vmatpush.msra.mxu0 0.0
        %854 = vmatpush.msra.mxu0 %v828
        %855 = vmatmul.f32.gmra.mxu0 %v825
        %v856 = vpop.f32.mrf.mxu0
        %v857 = vadd.f32 0.0, %v856
        %858 = vdwg.mxu0
        %859 = vmatpush.msra.mxu0 0.0
        %860 = vmatpush.msra.mxu0 0.0
        %861 = vmatpush.msra.mxu0 0.0
        %862 = vmatpush.msra.mxu0 0.0
        %863 = vmatpush.msra.mxu0 0.0
        %864 = vmatpush.msra.mxu0 0.0
        %865 = vmatpush.msra.mxu0 0.0
        %866 = vmatpush.msra.mxu0 0.0
        %867 = vmatpush.msra.mxu0 0.0
        %868 = vmatpush.msra.mxu0 0.0
        %869 = vmatpush.msra.mxu0 0.0
        %870 = vmatpush.msra.mxu0 0.0
        %871 = vmatpush.msra.mxu0 0.0
        %872 = vmatpush.msra.mxu0 0.0
        %873 = vmatpush.msra.mxu0 0.0
        %874 = vmatpush.msra.mxu0 %v831
        %875 = vmatmul.f32.gmra.mxu0 %v825
        %v876 = vpop.f32.mrf.mxu0
        %v877 = vadd.f32 0.0, %v876
        %878 = vdwg.mxu0
        %879 = vmatpush.msra.mxu0 0.0
        %880 = vmatpush.msra.mxu0 0.0
        %881 = vmatpush.msra.mxu0 0.0
        %882 = vmatpush.msra.mxu0 0.0
        %883 = vmatpush.msra.mxu0 0.0
        %884 = vmatpush.msra.mxu0 0.0
        %885 = vmatpush.msra.mxu0 0.0
        %886 = vmatpush.msra.mxu0 0.0
        %887 = vmatpush.msra.mxu0 0.0
        %888 = vmatpush.msra.mxu0 0.0
        %889 = vmatpush.msra.mxu0 0.0
        %890 = vmatpush.msra.mxu0 0.0
        %891 = vmatpush.msra.mxu0 0.0
        %892 = vmatpush.msra.mxu0 0.0
        %893 = vmatpush.msra.mxu0 0.0
        %894 = vmatpush.msra.mxu0 %v834
        %895 = vmatmul.f32.gmra.mxu0 %v825
        %v896 = vpop.f32.mrf.mxu0
        %v897 = vadd.f32 0.0, %v896
        %898 = vdwg.mxu0
        %899 = vmatpush.msra.mxu0 0.0
        %900 = vmatpush.msra.mxu0 0.0
        %901 = vmatpush.msra.mxu0 0.0
        %902 = vmatpush.msra.mxu0 0.0
        %903 = vmatpush.msra.mxu0 0.0
        %904 = vmatpush.msra.mxu0 0.0
        %905 = vmatpush.msra.mxu0 0.0
        %906 = vmatpush.msra.mxu0 0.0
        %907 = vmatpush.msra.mxu0 0.0
        %908 = vmatpush.msra.mxu0 0.0
        %909 = vmatpush.msra.mxu0 0.0
        %910 = vmatpush.msra.mxu0 0.0
        %911 = vmatpush.msra.mxu0 0.0
        %912 = vmatpush.msra.mxu0 0.0
        %913 = vmatpush.msra.mxu0 0.0
        %914 = vmatpush.msra.mxu0 %v837
        %915 = vmatmul.f32.gmra.mxu0 %v825
        %v916 = vpop.f32.mrf.mxu0
        %v917 = vadd.f32 0.0, %v916
        %918 = vdwg.mxu0
        %v919 = vadd.f32 %v790, %v857
        %v920 = vadd.f32 %v791, %v877
        %v921 = vadd.f32 %v792, %v897
        %v922 = vadd.f32 %v793, %v917
        %s923 = scalar_lea.vmem %s2, 16
        %v924 = vld [vmem:[%s923] sm:$0xf]
        %v926 = vsel %vm473, %v924, 0
        %v928 = vsel %vm477, %v403, 0
        %v930 = vsel %vm477, %v404, 0
        %v932 = vsel %vm477, %v409, 0
        %v934 = vsel %vm477, %v410, 0
        %936 = vmatpush.msra.mxu0 0.0
        %937 = vmatpush.msra.mxu0 0.0
        %938 = vmatpush.msra.mxu0 0.0
        %939 = vmatpush.msra.mxu0 0.0
        %940 = vmatpush.msra.mxu0 0.0
        %941 = vmatpush.msra.mxu0 0.0
        %942 = vmatpush.msra.mxu0 0.0
        %943 = vmatpush.msra.mxu0 0.0
        %944 = vmatpush.msra.mxu0 0.0
        %945 = vmatpush.msra.mxu0 0.0
        %946 = vmatpush.msra.mxu0 0.0
        %947 = vmatpush.msra.mxu0 0.0
        %948 = vmatpush.msra.mxu0 0.0
        %949 = vmatpush.msra.mxu0 0.0
        %950 = vmatpush.msra.mxu0 0.0
        %951 = vmatpush.msra.mxu0 %v928
        %952 = vmatmul.f32.gmra.mxu0 %v926
        %v953 = vpop.f32.mrf.mxu0
        %v954 = vadd.f32 0.0, %v953
        %955 = vdwg.mxu0
        %956 = vmatpush.msra.mxu0 0.0
        %957 = vmatpush.msra.mxu0 0.0
        %958 = vmatpush.msra.mxu0 0.0
        %959 = vmatpush.msra.mxu0 0.0
        %960 = vmatpush.msra.mxu0 0.0
        %961 = vmatpush.msra.mxu0 0.0
        %962 = vmatpush.msra.mxu0 0.0
        %963 = vmatpush.msra.mxu0 0.0
        %964 = vmatpush.msra.mxu0 0.0
        %965 = vmatpush.msra.mxu0 0.0
        %966 = vmatpush.msra.mxu0 0.0
        %967 = vmatpush.msra.mxu0 0.0
        %968 = vmatpush.msra.mxu0 0.0
        %969 = vmatpush.msra.mxu0 0.0
        %970 = vmatpush.msra.mxu0 0.0
        %971 = vmatpush.msra.mxu0 %v930
        %972 = vmatmul.f32.gmra.mxu0 %v926
        %v973 = vpop.f32.mrf.mxu0
        %v974 = vadd.f32 0.0, %v973
        %975 = vdwg.mxu0
        %976 = vmatpush.msra.mxu0 0.0
        %977 = vmatpush.msra.mxu0 0.0
        %978 = vmatpush.msra.mxu0 0.0
        %979 = vmatpush.msra.mxu0 0.0
        %980 = vmatpush.msra.mxu0 0.0
        %981 = vmatpush.msra.mxu0 0.0
        %982 = vmatpush.msra.mxu0 0.0
        %983 = vmatpush.msra.mxu0 0.0
        %984 = vmatpush.msra.mxu0 0.0
        %985 = vmatpush.msra.mxu0 0.0
        %986 = vmatpush.msra.mxu0 0.0
        %987 = vmatpush.msra.mxu0 0.0
        %988 = vmatpush.msra.mxu0 0.0
        %989 = vmatpush.msra.mxu0 0.0
        %990 = vmatpush.msra.mxu0 0.0
        %991 = vmatpush.msra.mxu0 %v932
        %992 = vmatmul.f32.gmra.mxu0 %v926
        %v993 = vpop.f32.mrf.mxu0
        %v994 = vadd.f32 0.0, %v993
        %995 = vdwg.mxu0
        %996 = vmatpush.msra.mxu0 0.0
        %997 = vmatpush.msra.mxu0 0.0
        %998 = vmatpush.msra.mxu0 0.0
        %999 = vmatpush.msra.mxu0 0.0
        %1000 = vmatpush.msra.mxu0 0.0
        %1001 = vmatpush.msra.mxu0 0.0
        %1002 = vmatpush.msra.mxu0 0.0
        %1003 = vmatpush.msra.mxu0 0.0
        %1004 = vmatpush.msra.mxu0 0.0
        %1005 = vmatpush.msra.mxu0 0.0
        %1006 = vmatpush.msra.mxu0 0.0
        %1007 = vmatpush.msra.mxu0 0.0
        %1008 = vmatpush.msra.mxu0 0.0
        %1009 = vmatpush.msra.mxu0 0.0
        %1010 = vmatpush.msra.mxu0 0.0
        %1011 = vmatpush.msra.mxu0 %v934
        %1012 = vmatmul.f32.gmra.mxu0 %v926
        %v1013 = vpop.f32.mrf.mxu0
        %v1014 = vadd.f32 0.0, %v1013
        %1015 = vdwg.mxu0
        %v1016 = vadd.f32 %v919, %v954
        %v1017 = vadd.f32 %v920, %v974
        %v1018 = vadd.f32 %v921, %v994
        %v1019 = vadd.f32 %v922, %v1014
        %1020 = vrot.lane.b32.xlu0 %v403, 127
        %v1021 = vpop.permute.xlu0 %1020
        %1022 = vrot.lane.b32.xlu0 %v404, 127
        %v1023 = vpop.permute.xlu0 %1022
        %1024 = vrot.lane.b32.xlu0 %v409, 127
        %v1025 = vpop.permute.xlu0 %1024
        %1026 = vrot.lane.b32.xlu0 %v410, 127
        %v1027 = vpop.permute.xlu0 %1026
        %vm1028 = vcmp.lt.s32.totalorder %v422, 127
        %v1029 = vsel %vm1028, %v1025, %v1027
        %v1030 = vsel %vm1028, %v1023, %v1025
        %v1031 = vsel %vm1028, %v1021, %v1023
        %v1032 = vsel %vm1028, %v1027, %v1021
        %s1033 = scalar_lea.vmem %s6, 20
        %v1034 = vld [vmem:[%s1033] sm:$0xf]
        %v1036 = vperm.slane %v1034, 0
        %v1037 = vperm.slane %v1034, 1
        %v1038 = vperm.slane %v1034, 2
        %v1039 = vperm.slane %v1034, 3
        %v1044 = vmul.f32 %v1031, %v1036
        %v1045 = vmul.f32 %v1030, %v1037
        %v1046 = vmul.f32 %v1029, %v1038
        %v1047 = vmul.f32 %v1032, %v1039
        %s1048 = scalar_lea.vmem %s2, 20
        %v1049 = vld [vmem:[%s1048] sm:$0xf]
        %v1051 = vsel %vm473, %v1049, 0
        %v1054 = vsel %vm477, %v1044, 0
        %v1057 = vsel %vm477, %v1045, 0
        %v1060 = vsel %vm477, %v1046, 0
        %v1063 = vsel %vm477, %v1047, 0
        %1065 = vmatpush.msra.mxu0 0.0
        %1066 = vmatpush.msra.mxu0 0.0
        %1067 = vmatpush.msra.mxu0 0.0
        %1068 = vmatpush.msra.mxu0 0.0
        %1069 = vmatpush.msra.mxu0 0.0
        %1070 = vmatpush.msra.mxu0 0.0
        %1071 = vmatpush.msra.mxu0 0.0
        %1072 = vmatpush.msra.mxu0 0.0
        %1073 = vmatpush.msra.mxu0 0.0
        %1074 = vmatpush.msra.mxu0 0.0
        %1075 = vmatpush.msra.mxu0 0.0
        %1076 = vmatpush.msra.mxu0 0.0
        %1077 = vmatpush.msra.mxu0 0.0
        %1078 = vmatpush.msra.mxu0 0.0
        %1079 = vmatpush.msra.mxu0 0.0
        %1080 = vmatpush.msra.mxu0 %v1054
        %1081 = vmatmul.f32.gmra.mxu0 %v1051
        %v1082 = vpop.f32.mrf.mxu0
        %v1083 = vadd.f32 0.0, %v1082
        %1084 = vdwg.mxu0
        %1085 = vmatpush.msra.mxu0 0.0
        %1086 = vmatpush.msra.mxu0 0.0
        %1087 = vmatpush.msra.mxu0 0.0
        %1088 = vmatpush.msra.mxu0 0.0
        %1089 = vmatpush.msra.mxu0 0.0
        %1090 = vmatpush.msra.mxu0 0.0
        %1091 = vmatpush.msra.mxu0 0.0
        %1092 = vmatpush.msra.mxu0 0.0
        %1093 = vmatpush.msra.mxu0 0.0
        %1094 = vmatpush.msra.mxu0 0.0
        %1095 = vmatpush.msra.mxu0 0.0
        %1096 = vmatpush.msra.mxu0 0.0
        %1097 = vmatpush.msra.mxu0 0.0
        %1098 = vmatpush.msra.mxu0 0.0
        %1099 = vmatpush.msra.mxu0 0.0
        %1100 = vmatpush.msra.mxu0 %v1057
        %1101 = vmatmul.f32.gmra.mxu0 %v1051
        %v1102 = vpop.f32.mrf.mxu0
        %v1103 = vadd.f32 0.0, %v1102
        %1104 = vdwg.mxu0
        %1105 = vmatpush.msra.mxu0 0.0
        %1106 = vmatpush.msra.mxu0 0.0
        %1107 = vmatpush.msra.mxu0 0.0
        %1108 = vmatpush.msra.mxu0 0.0
        %1109 = vmatpush.msra.mxu0 0.0
        %1110 = vmatpush.msra.mxu0 0.0
        %1111 = vmatpush.msra.mxu0 0.0
        %1112 = vmatpush.msra.mxu0 0.0
        %1113 = vmatpush.msra.mxu0 0.0
        %1114 = vmatpush.msra.mxu0 0.0
        %1115 = vmatpush.msra.mxu0 0.0
        %1116 = vmatpush.msra.mxu0 0.0
        %1117 = vmatpush.msra.mxu0 0.0
        %1118 = vmatpush.msra.mxu0 0.0
        %1119 = vmatpush.msra.mxu0 0.0
        %1120 = vmatpush.msra.mxu0 %v1060
        %1121 = vmatmul.f32.gmra.mxu0 %v1051
        %v1122 = vpop.f32.mrf.mxu0
        %v1123 = vadd.f32 0.0, %v1122
        %1124 = vdwg.mxu0
        %1125 = vmatpush.msra.mxu0 0.0
        %1126 = vmatpush.msra.mxu0 0.0
        %1127 = vmatpush.msra.mxu0 0.0
        %1128 = vmatpush.msra.mxu0 0.0
        %1129 = vmatpush.msra.mxu0 0.0
        %1130 = vmatpush.msra.mxu0 0.0
        %1131 = vmatpush.msra.mxu0 0.0
        %1132 = vmatpush.msra.mxu0 0.0
        %1133 = vmatpush.msra.mxu0 0.0
        %1134 = vmatpush.msra.mxu0 0.0
        %1135 = vmatpush.msra.mxu0 0.0
        %1136 = vmatpush.msra.mxu0 0.0
        %1137 = vmatpush.msra.mxu0 0.0
        %1138 = vmatpush.msra.mxu0 0.0
        %1139 = vmatpush.msra.mxu0 0.0
        %1140 = vmatpush.msra.mxu0 %v1063
        %1141 = vmatmul.f32.gmra.mxu0 %v1051
        %v1142 = vpop.f32.mrf.mxu0
        %v1143 = vadd.f32 0.0, %v1142
        %1144 = vdwg.mxu0
        %v1145 = vadd.f32 %v1016, %v1083
        %v1146 = vadd.f32 %v1017, %v1103
        %v1147 = vadd.f32 %v1018, %v1123
        %v1148 = vadd.f32 %v1019, %v1143
        %1149 = vrot.lane.b32.xlu0 %v403, 113
        %v1150 = vpop.permute.xlu0 %1149
        %1151 = vrot.lane.b32.xlu0 %v404, 113
        %v1152 = vpop.permute.xlu0 %1151
        %1153 = vrot.lane.b32.xlu0 %v409, 113
        %v1154 = vpop.permute.xlu0 %1153
        %1155 = vrot.lane.b32.xlu0 %v410, 113
        %v1156 = vpop.permute.xlu0 %1155
        %vm1157 = vcmp.lt.s32.totalorder %v422, 113
        %v1158 = vsel %vm1157, %v1154, %v1156
        %v1159 = vsel %vm1157, %v1152, %v1154
        %v1160 = vsel %vm1157, %v1150, %v1152
        %v1161 = vsel %vm1157, %v1156, %v1150
        %s1162 = scalar_lea.vmem %s6, 24
        %v1163 = vld [vmem:[%s1162] sm:$0xf]
        %v1165 = vperm.slane %v1163, 0
        %v1166 = vperm.slane %v1163, 1
        %v1167 = vperm.slane %v1163, 2
        %v1168 = vperm.slane %v1163, 3
        %v1173 = vmul.f32 %v1160, %v1165
        %v1174 = vmul.f32 %v1159, %v1166
        %v1175 = vmul.f32 %v1158, %v1167
        %v1176 = vmul.f32 %v1161, %v1168
        %s1177 = scalar_lea.vmem %s2, 24
        %v1178 = vld [vmem:[%s1177] sm:$0xf]
        %v1180 = vsel %vm473, %v1178, 0
        %v1183 = vsel %vm477, %v1173, 0
        %v1186 = vsel %vm477, %v1174, 0
        %v1189 = vsel %vm477, %v1175, 0
        %v1192 = vsel %vm477, %v1176, 0
        %1194 = vmatpush.msra.mxu0 0.0
        %1195 = vmatpush.msra.mxu0 0.0
        %1196 = vmatpush.msra.mxu0 0.0
        %1197 = vmatpush.msra.mxu0 0.0
        %1198 = vmatpush.msra.mxu0 0.0
        %1199 = vmatpush.msra.mxu0 0.0
        %1200 = vmatpush.msra.mxu0 0.0
        %1201 = vmatpush.msra.mxu0 0.0
        %1202 = vmatpush.msra.mxu0 0.0
        %1203 = vmatpush.msra.mxu0 0.0
        %1204 = vmatpush.msra.mxu0 0.0
        %1205 = vmatpush.msra.mxu0 0.0
        %1206 = vmatpush.msra.mxu0 0.0
        %1207 = vmatpush.msra.mxu0 0.0
        %1208 = vmatpush.msra.mxu0 0.0
        %1209 = vmatpush.msra.mxu0 %v1183
        %1210 = vmatmul.f32.gmra.mxu0 %v1180
        %v1211 = vpop.f32.mrf.mxu0
        %v1212 = vadd.f32 0.0, %v1211
        %1213 = vdwg.mxu0
        %1214 = vmatpush.msra.mxu0 0.0
        %1215 = vmatpush.msra.mxu0 0.0
        %1216 = vmatpush.msra.mxu0 0.0
        %1217 = vmatpush.msra.mxu0 0.0
        %1218 = vmatpush.msra.mxu0 0.0
        %1219 = vmatpush.msra.mxu0 0.0
        %1220 = vmatpush.msra.mxu0 0.0
        %1221 = vmatpush.msra.mxu0 0.0
        %1222 = vmatpush.msra.mxu0 0.0
        %1223 = vmatpush.msra.mxu0 0.0
        %1224 = vmatpush.msra.mxu0 0.0
        %1225 = vmatpush.msra.mxu0 0.0
        %1226 = vmatpush.msra.mxu0 0.0
        %1227 = vmatpush.msra.mxu0 0.0
        %1228 = vmatpush.msra.mxu0 0.0
        %1229 = vmatpush.msra.mxu0 %v1186
        %1230 = vmatmul.f32.gmra.mxu0 %v1180
        %v1231 = vpop.f32.mrf.mxu0
        %v1232 = vadd.f32 0.0, %v1231
        %1233 = vdwg.mxu0
        %1234 = vmatpush.msra.mxu0 0.0
        %1235 = vmatpush.msra.mxu0 0.0
        %1236 = vmatpush.msra.mxu0 0.0
        %1237 = vmatpush.msra.mxu0 0.0
        %1238 = vmatpush.msra.mxu0 0.0
        %1239 = vmatpush.msra.mxu0 0.0
        %1240 = vmatpush.msra.mxu0 0.0
        %1241 = vmatpush.msra.mxu0 0.0
        %1242 = vmatpush.msra.mxu0 0.0
        %1243 = vmatpush.msra.mxu0 0.0
        %1244 = vmatpush.msra.mxu0 0.0
        %1245 = vmatpush.msra.mxu0 0.0
        %1246 = vmatpush.msra.mxu0 0.0
        %1247 = vmatpush.msra.mxu0 0.0
        %1248 = vmatpush.msra.mxu0 0.0
        %1249 = vmatpush.msra.mxu0 %v1189
        %1250 = vmatmul.f32.gmra.mxu0 %v1180
        %v1251 = vpop.f32.mrf.mxu0
        %v1252 = vadd.f32 0.0, %v1251
        %1253 = vdwg.mxu0
        %1254 = vmatpush.msra.mxu0 0.0
        %1255 = vmatpush.msra.mxu0 0.0
        %1256 = vmatpush.msra.mxu0 0.0
        %1257 = vmatpush.msra.mxu0 0.0
        %1258 = vmatpush.msra.mxu0 0.0
        %1259 = vmatpush.msra.mxu0 0.0
        %1260 = vmatpush.msra.mxu0 0.0
        %1261 = vmatpush.msra.mxu0 0.0
        %1262 = vmatpush.msra.mxu0 0.0
        %1263 = vmatpush.msra.mxu0 0.0
        %1264 = vmatpush.msra.mxu0 0.0
        %1265 = vmatpush.msra.mxu0 0.0
        %1266 = vmatpush.msra.mxu0 0.0
        %1267 = vmatpush.msra.mxu0 0.0
        %1268 = vmatpush.msra.mxu0 0.0
        %1269 = vmatpush.msra.mxu0 %v1192
        %1270 = vmatmul.f32.gmra.mxu0 %v1180
        %v1271 = vpop.f32.mrf.mxu0
        %v1272 = vadd.f32 0.0, %v1271
        %1273 = vdwg.mxu0
        %v1274 = vadd.f32 %v1145, %v1212
        %v1275 = vadd.f32 %v1146, %v1232
        %v1276 = vadd.f32 %v1147, %v1252
        %v1277 = vadd.f32 %v1148, %v1272
        %1278 = vrot.lane.b32.xlu0 %v403, 112
        %v1279 = vpop.permute.xlu0 %1278
        %1280 = vrot.lane.b32.xlu0 %v404, 112
        %v1281 = vpop.permute.xlu0 %1280
        %1282 = vrot.lane.b32.xlu0 %v409, 112
        %v1283 = vpop.permute.xlu0 %1282
        %1284 = vrot.lane.b32.xlu0 %v410, 112
        %v1285 = vpop.permute.xlu0 %1284
        %vm1286 = vcmp.lt.s32.totalorder %v422, 112
        %v1287 = vsel %vm1286, %v1283, %v1285
        %v1288 = vsel %vm1286, %v1281, %v1283
        %v1289 = vsel %vm1286, %v1279, %v1281
        %v1290 = vsel %vm1286, %v1285, %v1279
        %s1291 = scalar_lea.vmem %s6, 28
        %v1292 = vld [vmem:[%s1291] sm:$0xf]
        %v1294 = vperm.slane %v1292, 0
        %v1295 = vperm.slane %v1292, 1
        %v1296 = vperm.slane %v1292, 2
        %v1297 = vperm.slane %v1292, 3
        %v1302 = vmul.f32 %v1289, %v1294
        %v1303 = vmul.f32 %v1288, %v1295
        %v1304 = vmul.f32 %v1287, %v1296
        %v1305 = vmul.f32 %v1290, %v1297
        %s1306 = scalar_lea.vmem %s2, 28
        %v1307 = vld [vmem:[%s1306] sm:$0xf]
        %v1309 = vsel %vm473, %v1307, 0
        %v1312 = vsel %vm477, %v1302, 0
        %v1315 = vsel %vm477, %v1303, 0
        %v1318 = vsel %vm477, %v1304, 0
        %v1321 = vsel %vm477, %v1305, 0
        %1323 = vmatpush.msra.mxu0 0.0
        %1324 = vmatpush.msra.mxu0 0.0
        %1325 = vmatpush.msra.mxu0 0.0
        %1326 = vmatpush.msra.mxu0 0.0
        %1327 = vmatpush.msra.mxu0 0.0
        %1328 = vmatpush.msra.mxu0 0.0
        %1329 = vmatpush.msra.mxu0 0.0
        %1330 = vmatpush.msra.mxu0 0.0
        %1331 = vmatpush.msra.mxu0 0.0
        %1332 = vmatpush.msra.mxu0 0.0
        %1333 = vmatpush.msra.mxu0 0.0
        %1334 = vmatpush.msra.mxu0 0.0
        %1335 = vmatpush.msra.mxu0 0.0
        %1336 = vmatpush.msra.mxu0 0.0
        %1337 = vmatpush.msra.mxu0 0.0
        %1338 = vmatpush.msra.mxu0 %v1312
        %1339 = vmatmul.f32.gmra.mxu0 %v1309
        %v1340 = vpop.f32.mrf.mxu0
        %v1341 = vadd.f32 0.0, %v1340
        %1342 = vdwg.mxu0
        %1343 = vmatpush.msra.mxu0 0.0
        %1344 = vmatpush.msra.mxu0 0.0
        %1345 = vmatpush.msra.mxu0 0.0
        %1346 = vmatpush.msra.mxu0 0.0
        %1347 = vmatpush.msra.mxu0 0.0
        %1348 = vmatpush.msra.mxu0 0.0
        %1349 = vmatpush.msra.mxu0 0.0
        %1350 = vmatpush.msra.mxu0 0.0
        %1351 = vmatpush.msra.mxu0 0.0
        %1352 = vmatpush.msra.mxu0 0.0
        %1353 = vmatpush.msra.mxu0 0.0
        %1354 = vmatpush.msra.mxu0 0.0
        %1355 = vmatpush.msra.mxu0 0.0
        %1356 = vmatpush.msra.mxu0 0.0
        %1357 = vmatpush.msra.mxu0 0.0
        %1358 = vmatpush.msra.mxu0 %v1315
        %1359 = vmatmul.f32.gmra.mxu0 %v1309
        %v1360 = vpop.f32.mrf.mxu0
        %v1361 = vadd.f32 0.0, %v1360
        %1362 = vdwg.mxu0
        %1363 = vmatpush.msra.mxu0 0.0
        %1364 = vmatpush.msra.mxu0 0.0
        %1365 = vmatpush.msra.mxu0 0.0
        %1366 = vmatpush.msra.mxu0 0.0
        %1367 = vmatpush.msra.mxu0 0.0
        %1368 = vmatpush.msra.mxu0 0.0
        %1369 = vmatpush.msra.mxu0 0.0
        %1370 = vmatpush.msra.mxu0 0.0
        %1371 = vmatpush.msra.mxu0 0.0
        %1372 = vmatpush.msra.mxu0 0.0
        %1373 = vmatpush.msra.mxu0 0.0
        %1374 = vmatpush.msra.mxu0 0.0
        %1375 = vmatpush.msra.mxu0 0.0
        %1376 = vmatpush.msra.mxu0 0.0
        %1377 = vmatpush.msra.mxu0 0.0
        %1378 = vmatpush.msra.mxu0 %v1318
        %1379 = vmatmul.f32.gmra.mxu0 %v1309
        %v1380 = vpop.f32.mrf.mxu0
        %v1381 = vadd.f32 0.0, %v1380
        %1382 = vdwg.mxu0
        %1383 = vmatpush.msra.mxu0 0.0
        %1384 = vmatpush.msra.mxu0 0.0
        %1385 = vmatpush.msra.mxu0 0.0
        %1386 = vmatpush.msra.mxu0 0.0
        %1387 = vmatpush.msra.mxu0 0.0
        %1388 = vmatpush.msra.mxu0 0.0
        %1389 = vmatpush.msra.mxu0 0.0
        %1390 = vmatpush.msra.mxu0 0.0
        %1391 = vmatpush.msra.mxu0 0.0
        %1392 = vmatpush.msra.mxu0 0.0
        %1393 = vmatpush.msra.mxu0 0.0
        %1394 = vmatpush.msra.mxu0 0.0
        %1395 = vmatpush.msra.mxu0 0.0
        %1396 = vmatpush.msra.mxu0 0.0
        %1397 = vmatpush.msra.mxu0 0.0
        %1398 = vmatpush.msra.mxu0 %v1321
        %1399 = vmatmul.f32.gmra.mxu0 %v1309
        %v1400 = vpop.f32.mrf.mxu0
        %v1401 = vadd.f32 0.0, %v1400
        %1402 = vdwg.mxu0
        %v1403 = vadd.f32 %v1274, %v1341
        %v1404 = vadd.f32 %v1275, %v1361
        %v1405 = vadd.f32 %v1276, %v1381
        %v1406 = vadd.f32 %v1277, %v1401
        %1407 = vrot.lane.b32.xlu0 %v403, 111
        %v1408 = vpop.permute.xlu0 %1407
        %1409 = vrot.lane.b32.xlu0 %v404, 111
        %v1410 = vpop.permute.xlu0 %1409
        %1411 = vrot.lane.b32.xlu0 %v409, 111
        %v1412 = vpop.permute.xlu0 %1411
        %1413 = vrot.lane.b32.xlu0 %v410, 111
        %v1414 = vpop.permute.xlu0 %1413
        %vm1415 = vcmp.lt.s32.totalorder %v422, 111
        %v1416 = vsel %vm1415, %v1412, %v1414
        %v1417 = vsel %vm1415, %v1410, %v1412
        %v1418 = vsel %vm1415, %v1408, %v1410
        %v1419 = vsel %vm1415, %v1414, %v1408
        %s1420 = scalar_lea.vmem %s6, 32
        %v1421 = vld [vmem:[%s1420] sm:$0xf]
        %v1423 = vperm.slane %v1421, 0
        %v1424 = vperm.slane %v1421, 1
        %v1425 = vperm.slane %v1421, 2
        %v1426 = vperm.slane %v1421, 3
        %v1431 = vmul.f32 %v1418, %v1423
        %v1432 = vmul.f32 %v1417, %v1424
        %v1433 = vmul.f32 %v1416, %v1425
        %v1434 = vmul.f32 %v1419, %v1426
        %s1435 = scalar_lea.vmem %s2, 32
        %v1436 = vld [vmem:[%s1435] sm:$0xf]
        %v1438 = vsel %vm473, %v1436, 0
        %v1441 = vsel %vm477, %v1431, 0
        %v1444 = vsel %vm477, %v1432, 0
        %v1447 = vsel %vm477, %v1433, 0
        %v1450 = vsel %vm477, %v1434, 0
        %1452 = vmatpush.msra.mxu0 0.0
        %1453 = vmatpush.msra.mxu0 0.0
        %1454 = vmatpush.msra.mxu0 0.0
        %1455 = vmatpush.msra.mxu0 0.0
        %1456 = vmatpush.msra.mxu0 0.0
        %1457 = vmatpush.msra.mxu0 0.0
        %1458 = vmatpush.msra.mxu0 0.0
        %1459 = vmatpush.msra.mxu0 0.0
        %1460 = vmatpush.msra.mxu0 0.0
        %1461 = vmatpush.msra.mxu0 0.0
        %1462 = vmatpush.msra.mxu0 0.0
        %1463 = vmatpush.msra.mxu0 0.0
        %1464 = vmatpush.msra.mxu0 0.0
        %1465 = vmatpush.msra.mxu0 0.0
        %1466 = vmatpush.msra.mxu0 0.0
        %1467 = vmatpush.msra.mxu0 %v1441
        %1468 = vmatmul.f32.gmra.mxu0 %v1438
        %v1469 = vpop.f32.mrf.mxu0
        %v1470 = vadd.f32 0.0, %v1469
        %1471 = vdwg.mxu0
        %1472 = vmatpush.msra.mxu0 0.0
        %1473 = vmatpush.msra.mxu0 0.0
        %1474 = vmatpush.msra.mxu0 0.0
        %1475 = vmatpush.msra.mxu0 0.0
        %1476 = vmatpush.msra.mxu0 0.0
        %1477 = vmatpush.msra.mxu0 0.0
        %1478 = vmatpush.msra.mxu0 0.0
        %1479 = vmatpush.msra.mxu0 0.0
        %1480 = vmatpush.msra.mxu0 0.0
        %1481 = vmatpush.msra.mxu0 0.0
        %1482 = vmatpush.msra.mxu0 0.0
        %1483 = vmatpush.msra.mxu0 0.0
        %1484 = vmatpush.msra.mxu0 0.0
        %1485 = vmatpush.msra.mxu0 0.0
        %1486 = vmatpush.msra.mxu0 0.0
        %1487 = vmatpush.msra.mxu0 %v1444
        %1488 = vmatmul.f32.gmra.mxu0 %v1438
        %v1489 = vpop.f32.mrf.mxu0
        %v1490 = vadd.f32 0.0, %v1489
        %1491 = vdwg.mxu0
        %1492 = vmatpush.msra.mxu0 0.0
        %1493 = vmatpush.msra.mxu0 0.0
        %1494 = vmatpush.msra.mxu0 0.0
        %1495 = vmatpush.msra.mxu0 0.0
        %1496 = vmatpush.msra.mxu0 0.0
        %1497 = vmatpush.msra.mxu0 0.0
        %1498 = vmatpush.msra.mxu0 0.0
        %1499 = vmatpush.msra.mxu0 0.0
        %1500 = vmatpush.msra.mxu0 0.0
        %1501 = vmatpush.msra.mxu0 0.0
        %1502 = vmatpush.msra.mxu0 0.0
        %1503 = vmatpush.msra.mxu0 0.0
        %1504 = vmatpush.msra.mxu0 0.0
        %1505 = vmatpush.msra.mxu0 0.0
        %1506 = vmatpush.msra.mxu0 0.0
        %1507 = vmatpush.msra.mxu0 %v1447
        %1508 = vmatmul.f32.gmra.mxu0 %v1438
        %v1509 = vpop.f32.mrf.mxu0
        %v1510 = vadd.f32 0.0, %v1509
        %1511 = vdwg.mxu0
        %1512 = vmatpush.msra.mxu0 0.0
        %1513 = vmatpush.msra.mxu0 0.0
        %1514 = vmatpush.msra.mxu0 0.0
        %1515 = vmatpush.msra.mxu0 0.0
        %1516 = vmatpush.msra.mxu0 0.0
        %1517 = vmatpush.msra.mxu0 0.0
        %1518 = vmatpush.msra.mxu0 0.0
        %1519 = vmatpush.msra.mxu0 0.0
        %1520 = vmatpush.msra.mxu0 0.0
        %1521 = vmatpush.msra.mxu0 0.0
        %1522 = vmatpush.msra.mxu0 0.0
        %1523 = vmatpush.msra.mxu0 0.0
        %1524 = vmatpush.msra.mxu0 0.0
        %1525 = vmatpush.msra.mxu0 0.0
        %1526 = vmatpush.msra.mxu0 0.0
        %1527 = vmatpush.msra.mxu0 %v1450
        %1528 = vmatmul.f32.gmra.mxu0 %v1438
        %v1529 = vpop.f32.mrf.mxu0
        %v1530 = vadd.f32 0.0, %v1529
        %1531 = vdwg.mxu0
        %v1532 = vadd.f32 %v1403, %v1470
        %v1533 = vadd.f32 %v1404, %v1490
        %v1534 = vadd.f32 %v1405, %v1510
        %v1535 = vadd.f32 %v1406, %v1530
        %v1536 = vld [vmem:[%s3] sm:$0xf]
        %1538 = vset.pattern.permute.xlu0 0
        %1539 = vperm.xlu0 %1538, %v1536
        %v1540 = vpop.permute.xlu0 %1539
        %v1542 = vadd.f32 %v1532, %v1540
        %v1543 = vadd.f32 %v1533, %v1540
        %v1544 = vadd.f32 %v1534, %v1540
        %v1545 = vadd.f32 %v1535, %v1540
        %v1546 = vmax.f32 %v1542, 0.0
        %v1547 = vmax.f32 %v1543, 0.0
        %v1548 = vmax.f32 %v1544, 0.0
        %v1549 = vmax.f32 %v1545, 0.0
        %v1550 = vadd.f32 %v388, %v1546
        %v1551 = vadd.f32 %v389, %v1547
        %v1552 = vadd.f32 %v394, %v1548
        %v1553 = vadd.f32 %v395, %v1549
        %1554 = vrot.lane.b32.xlu0 %v1550, 17
        %v1555 = vpop.permute.xlu0 %1554
        %1556 = vrot.lane.b32.xlu0 %v1551, 17
        %v1557 = vpop.permute.xlu0 %1556
        %1558 = vrot.lane.b32.xlu0 %v1552, 17
        %v1559 = vpop.permute.xlu0 %1558
        %1560 = vrot.lane.b32.xlu0 %v1553, 17
        %v1561 = vpop.permute.xlu0 %1560
        %v1562 = vsel %vm423, %v1559, %v1561
        %v1563 = vsel %vm423, %v1557, %v1559
        %v1564 = vsel %vm423, %v1555, %v1557
        %v1565 = vsel %vm423, %v1561, %v1555
        %v1566 = vmul.f32 %v1565, %v430
        %v1567 = vmul.f32 %v1564, %v431
        %v1568 = vmul.f32 %v1563, %v432
        %v1569 = vmul.f32 %v1562, %v433
        %v1570 = vld [vmem:[%s4] sm:$0xf]
        %1571 = vrot.lane.b32.xlu0 %v1550, 16
        %v1572 = vpop.permute.xlu0 %1571
        %1573 = vrot.lane.b32.xlu0 %v1551, 16
        %v1574 = vpop.permute.xlu0 %1573
        %1575 = vrot.lane.b32.xlu0 %v1552, 16
        %v1576 = vpop.permute.xlu0 %1575
        %1577 = vrot.lane.b32.xlu0 %v1553, 16
        %v1578 = vpop.permute.xlu0 %1577
        %v1579 = vsel %vm451, %v1576, %v1578
        %v1580 = vsel %vm451, %v1574, %v1576
        %v1581 = vsel %vm451, %v1572, %v1574
        %v1582 = vsel %vm451, %v1578, %v1572
        %v1583 = vmul.f32 %v1582, %v459
        %v1584 = vmul.f32 %v1581, %v460
        %v1585 = vmul.f32 %v1580, %v461
        %v1586 = vmul.f32 %v1579, %v462
        %s1587 = scalar_lea.vmem %s4, 4
        %v1588 = vld [vmem:[%s1587] sm:$0xf]
        %v1590 = vsel %vm473, %v1588, 0
        %v1593 = vsel %vm477, %v1583, 0
        %v1596 = vsel %vm477, %v1584, 0
        %v1599 = vsel %vm477, %v1585, 0
        %v1602 = vsel %vm477, %v1586, 0
        %1604 = vmatpush.msra.mxu0 0.0
        %1605 = vmatpush.msra.mxu0 0.0
        %1606 = vmatpush.msra.mxu0 0.0
        %1607 = vmatpush.msra.mxu0 0.0
        %1608 = vmatpush.msra.mxu0 0.0
        %1609 = vmatpush.msra.mxu0 0.0
        %1610 = vmatpush.msra.mxu0 0.0
        %1611 = vmatpush.msra.mxu0 0.0
        %1612 = vmatpush.msra.mxu0 0.0
        %1613 = vmatpush.msra.mxu0 0.0
        %1614 = vmatpush.msra.mxu0 0.0
        %1615 = vmatpush.msra.mxu0 0.0
        %1616 = vmatpush.msra.mxu0 0.0
        %1617 = vmatpush.msra.mxu0 0.0
        %1618 = vmatpush.msra.mxu0 0.0
        %1619 = vmatpush.msra.mxu0 %v1593
        %1620 = vmatmul.f32.gmra.mxu0 %v1590
        %v1621 = vpop.f32.mrf.mxu0
        %v1622 = vadd.f32 0.0, %v1621
        %1623 = vdwg.mxu0
        %1624 = vmatpush.msra.mxu0 0.0
        %1625 = vmatpush.msra.mxu0 0.0
        %1626 = vmatpush.msra.mxu0 0.0
        %1627 = vmatpush.msra.mxu0 0.0
        %1628 = vmatpush.msra.mxu0 0.0
        %1629 = vmatpush.msra.mxu0 0.0
        %1630 = vmatpush.msra.mxu0 0.0
        %1631 = vmatpush.msra.mxu0 0.0
        %1632 = vmatpush.msra.mxu0 0.0
        %1633 = vmatpush.msra.mxu0 0.0
        %1634 = vmatpush.msra.mxu0 0.0
        %1635 = vmatpush.msra.mxu0 0.0
        %1636 = vmatpush.msra.mxu0 0.0
        %1637 = vmatpush.msra.mxu0 0.0
        %1638 = vmatpush.msra.mxu0 0.0
        %1639 = vmatpush.msra.mxu0 %v1596
        %1640 = vmatmul.f32.gmra.mxu0 %v1590
        %v1641 = vpop.f32.mrf.mxu0
        %v1642 = vadd.f32 0.0, %v1641
        %1643 = vdwg.mxu0
        %1644 = vmatpush.msra.mxu0 0.0
        %1645 = vmatpush.msra.mxu0 0.0
        %1646 = vmatpush.msra.mxu0 0.0
        %1647 = vmatpush.msra.mxu0 0.0
        %1648 = vmatpush.msra.mxu0 0.0
        %1649 = vmatpush.msra.mxu0 0.0
        %1650 = vmatpush.msra.mxu0 0.0
        %1651 = vmatpush.msra.mxu0 0.0
        %1652 = vmatpush.msra.mxu0 0.0
        %1653 = vmatpush.msra.mxu0 0.0
        %1654 = vmatpush.msra.mxu0 0.0
        %1655 = vmatpush.msra.mxu0 0.0
        %1656 = vmatpush.msra.mxu0 0.0
        %1657 = vmatpush.msra.mxu0 0.0
        %1658 = vmatpush.msra.mxu0 0.0
        %1659 = vmatpush.msra.mxu0 %v1599
        %1660 = vmatmul.f32.gmra.mxu0 %v1590
        %v1661 = vpop.f32.mrf.mxu0
        %v1662 = vadd.f32 0.0, %v1661
        %1663 = vdwg.mxu0
        %1664 = vmatpush.msra.mxu0 0.0
        %1665 = vmatpush.msra.mxu0 0.0
        %1666 = vmatpush.msra.mxu0 0.0
        %1667 = vmatpush.msra.mxu0 0.0
        %1668 = vmatpush.msra.mxu0 0.0
        %1669 = vmatpush.msra.mxu0 0.0
        %1670 = vmatpush.msra.mxu0 0.0
        %1671 = vmatpush.msra.mxu0 0.0
        %1672 = vmatpush.msra.mxu0 0.0
        %1673 = vmatpush.msra.mxu0 0.0
        %1674 = vmatpush.msra.mxu0 0.0
        %1675 = vmatpush.msra.mxu0 0.0
        %1676 = vmatpush.msra.mxu0 0.0
        %1677 = vmatpush.msra.mxu0 0.0
        %1678 = vmatpush.msra.mxu0 0.0
        %1679 = vmatpush.msra.mxu0 %v1602
        %1680 = vmatmul.f32.gmra.mxu0 %v1590
        %v1681 = vpop.f32.mrf.mxu0
        %v1682 = vadd.f32 0.0, %v1681
        %1683 = vdwg.mxu0
        %v1685 = vsel %vm473, %v1570, 0
        %v1688 = vsel %vm477, %v1566, 0
        %v1691 = vsel %vm477, %v1567, 0
        %v1694 = vsel %vm477, %v1568, 0
        %v1697 = vsel %vm477, %v1569, 0
        %1699 = vmatpush.msra.mxu0 0.0
        %1700 = vmatpush.msra.mxu0 0.0
        %1701 = vmatpush.msra.mxu0 0.0
        %1702 = vmatpush.msra.mxu0 0.0
        %1703 = vmatpush.msra.mxu0 0.0
        %1704 = vmatpush.msra.mxu0 0.0
        %1705 = vmatpush.msra.mxu0 0.0
        %1706 = vmatpush.msra.mxu0 0.0
        %1707 = vmatpush.msra.mxu0 0.0
        %1708 = vmatpush.msra.mxu0 0.0
        %1709 = vmatpush.msra.mxu0 0.0
        %1710 = vmatpush.msra.mxu0 0.0
        %1711 = vmatpush.msra.mxu0 0.0
        %1712 = vmatpush.msra.mxu0 0.0
        %1713 = vmatpush.msra.mxu0 0.0
        %1714 = vmatpush.msra.mxu0 %v1688
        %1715 = vmatmul.f32.gmra.mxu0 %v1685
        %v1716 = vpop.f32.mrf.mxu0
        %v1717 = vadd.f32 %v1622, %v1716
        %1718 = vdwg.mxu0
        %1719 = vmatpush.msra.mxu0 0.0
        %1720 = vmatpush.msra.mxu0 0.0
        %1721 = vmatpush.msra.mxu0 0.0
        %1722 = vmatpush.msra.mxu0 0.0
        %1723 = vmatpush.msra.mxu0 0.0
        %1724 = vmatpush.msra.mxu0 0.0
        %1725 = vmatpush.msra.mxu0 0.0
        %1726 = vmatpush.msra.mxu0 0.0
        %1727 = vmatpush.msra.mxu0 0.0
        %1728 = vmatpush.msra.mxu0 0.0
        %1729 = vmatpush.msra.mxu0 0.0
        %1730 = vmatpush.msra.mxu0 0.0
        %1731 = vmatpush.msra.mxu0 0.0
        %1732 = vmatpush.msra.mxu0 0.0
        %1733 = vmatpush.msra.mxu0 0.0
        %1734 = vmatpush.msra.mxu0 %v1691
        %1735 = vmatmul.f32.gmra.mxu0 %v1685
        %v1736 = vpop.f32.mrf.mxu0
        %v1737 = vadd.f32 %v1642, %v1736
        %1738 = vdwg.mxu0
        %1739 = vmatpush.msra.mxu0 0.0
        %1740 = vmatpush.msra.mxu0 0.0
        %1741 = vmatpush.msra.mxu0 0.0
        %1742 = vmatpush.msra.mxu0 0.0
        %1743 = vmatpush.msra.mxu0 0.0
        %1744 = vmatpush.msra.mxu0 0.0
        %1745 = vmatpush.msra.mxu0 0.0
        %1746 = vmatpush.msra.mxu0 0.0
        %1747 = vmatpush.msra.mxu0 0.0
        %1748 = vmatpush.msra.mxu0 0.0
        %1749 = vmatpush.msra.mxu0 0.0
        %1750 = vmatpush.msra.mxu0 0.0
        %1751 = vmatpush.msra.mxu0 0.0
        %1752 = vmatpush.msra.mxu0 0.0
        %1753 = vmatpush.msra.mxu0 0.0
        %1754 = vmatpush.msra.mxu0 %v1694
        %1755 = vmatmul.f32.gmra.mxu0 %v1685
        %v1756 = vpop.f32.mrf.mxu0
        %v1757 = vadd.f32 %v1662, %v1756
        %1758 = vdwg.mxu0
        %1759 = vmatpush.msra.mxu0 0.0
        %1760 = vmatpush.msra.mxu0 0.0
        %1761 = vmatpush.msra.mxu0 0.0
        %1762 = vmatpush.msra.mxu0 0.0
        %1763 = vmatpush.msra.mxu0 0.0
        %1764 = vmatpush.msra.mxu0 0.0
        %1765 = vmatpush.msra.mxu0 0.0
        %1766 = vmatpush.msra.mxu0 0.0
        %1767 = vmatpush.msra.mxu0 0.0
        %1768 = vmatpush.msra.mxu0 0.0
        %1769 = vmatpush.msra.mxu0 0.0
        %1770 = vmatpush.msra.mxu0 0.0
        %1771 = vmatpush.msra.mxu0 0.0
        %1772 = vmatpush.msra.mxu0 0.0
        %1773 = vmatpush.msra.mxu0 0.0
        %1774 = vmatpush.msra.mxu0 %v1697
        %1775 = vmatmul.f32.gmra.mxu0 %v1685
        %v1776 = vpop.f32.mrf.mxu0
        %v1777 = vadd.f32 %v1682, %v1776
        %1778 = vdwg.mxu0
        %1779 = vrot.lane.b32.xlu0 %v1550, 15
        %v1780 = vpop.permute.xlu0 %1779
        %1781 = vrot.lane.b32.xlu0 %v1551, 15
        %v1782 = vpop.permute.xlu0 %1781
        %1783 = vrot.lane.b32.xlu0 %v1552, 15
        %v1784 = vpop.permute.xlu0 %1783
        %1785 = vrot.lane.b32.xlu0 %v1553, 15
        %v1786 = vpop.permute.xlu0 %1785
        %v1787 = vsel %vm673, %v1784, %v1786
        %v1788 = vsel %vm673, %v1782, %v1784
        %v1789 = vsel %vm673, %v1780, %v1782
        %v1790 = vsel %vm673, %v1786, %v1780
        %v1791 = vmul.f32 %v1790, %v681
        %v1792 = vmul.f32 %v1789, %v682
        %v1793 = vmul.f32 %v1788, %v683
        %v1794 = vmul.f32 %v1787, %v684
        %s1795 = scalar_lea.vmem %s4, 8
        %v1796 = vld [vmem:[%s1795] sm:$0xf]
        %v1798 = vsel %vm473, %v1796, 0
        %v1801 = vsel %vm477, %v1791, 0
        %v1804 = vsel %vm477, %v1792, 0
        %v1807 = vsel %vm477, %v1793, 0
        %v1810 = vsel %vm477, %v1794, 0
        %1812 = vmatpush.msra.mxu0 0.0
        %1813 = vmatpush.msra.mxu0 0.0
        %1814 = vmatpush.msra.mxu0 0.0
        %1815 = vmatpush.msra.mxu0 0.0
        %1816 = vmatpush.msra.mxu0 0.0
        %1817 = vmatpush.msra.mxu0 0.0
        %1818 = vmatpush.msra.mxu0 0.0
        %1819 = vmatpush.msra.mxu0 0.0
        %1820 = vmatpush.msra.mxu0 0.0
        %1821 = vmatpush.msra.mxu0 0.0
        %1822 = vmatpush.msra.mxu0 0.0
        %1823 = vmatpush.msra.mxu0 0.0
        %1824 = vmatpush.msra.mxu0 0.0
        %1825 = vmatpush.msra.mxu0 0.0
        %1826 = vmatpush.msra.mxu0 0.0
        %1827 = vmatpush.msra.mxu0 %v1801
        %1828 = vmatmul.f32.gmra.mxu0 %v1798
        %v1829 = vpop.f32.mrf.mxu0
        %v1830 = vadd.f32 0.0, %v1829
        %1831 = vdwg.mxu0
        %1832 = vmatpush.msra.mxu0 0.0
        %1833 = vmatpush.msra.mxu0 0.0
        %1834 = vmatpush.msra.mxu0 0.0
        %1835 = vmatpush.msra.mxu0 0.0
        %1836 = vmatpush.msra.mxu0 0.0
        %1837 = vmatpush.msra.mxu0 0.0
        %1838 = vmatpush.msra.mxu0 0.0
        %1839 = vmatpush.msra.mxu0 0.0
        %1840 = vmatpush.msra.mxu0 0.0
        %1841 = vmatpush.msra.mxu0 0.0
        %1842 = vmatpush.msra.mxu0 0.0
        %1843 = vmatpush.msra.mxu0 0.0
        %1844 = vmatpush.msra.mxu0 0.0
        %1845 = vmatpush.msra.mxu0 0.0
        %1846 = vmatpush.msra.mxu0 0.0
        %1847 = vmatpush.msra.mxu0 %v1804
        %1848 = vmatmul.f32.gmra.mxu0 %v1798
        %v1849 = vpop.f32.mrf.mxu0
        %v1850 = vadd.f32 0.0, %v1849
        %1851 = vdwg.mxu0
        %1852 = vmatpush.msra.mxu0 0.0
        %1853 = vmatpush.msra.mxu0 0.0
        %1854 = vmatpush.msra.mxu0 0.0
        %1855 = vmatpush.msra.mxu0 0.0
        %1856 = vmatpush.msra.mxu0 0.0
        %1857 = vmatpush.msra.mxu0 0.0
        %1858 = vmatpush.msra.mxu0 0.0
        %1859 = vmatpush.msra.mxu0 0.0
        %1860 = vmatpush.msra.mxu0 0.0
        %1861 = vmatpush.msra.mxu0 0.0
        %1862 = vmatpush.msra.mxu0 0.0
        %1863 = vmatpush.msra.mxu0 0.0
        %1864 = vmatpush.msra.mxu0 0.0
        %1865 = vmatpush.msra.mxu0 0.0
        %1866 = vmatpush.msra.mxu0 0.0
        %1867 = vmatpush.msra.mxu0 %v1807
        %1868 = vmatmul.f32.gmra.mxu0 %v1798
        %v1869 = vpop.f32.mrf.mxu0
        %v1870 = vadd.f32 0.0, %v1869
        %1871 = vdwg.mxu0
        %1872 = vmatpush.msra.mxu0 0.0
        %1873 = vmatpush.msra.mxu0 0.0
        %1874 = vmatpush.msra.mxu0 0.0
        %1875 = vmatpush.msra.mxu0 0.0
        %1876 = vmatpush.msra.mxu0 0.0
        %1877 = vmatpush.msra.mxu0 0.0
        %1878 = vmatpush.msra.mxu0 0.0
        %1879 = vmatpush.msra.mxu0 0.0
        %1880 = vmatpush.msra.mxu0 0.0
        %1881 = vmatpush.msra.mxu0 0.0
        %1882 = vmatpush.msra.mxu0 0.0
        %1883 = vmatpush.msra.mxu0 0.0
        %1884 = vmatpush.msra.mxu0 0.0
        %1885 = vmatpush.msra.mxu0 0.0
        %1886 = vmatpush.msra.mxu0 0.0
        %1887 = vmatpush.msra.mxu0 %v1810
        %1888 = vmatmul.f32.gmra.mxu0 %v1798
        %v1889 = vpop.f32.mrf.mxu0
        %v1890 = vadd.f32 0.0, %v1889
        %1891 = vdwg.mxu0
        %v1892 = vadd.f32 %v1717, %v1830
        %v1893 = vadd.f32 %v1737, %v1850
        %v1894 = vadd.f32 %v1757, %v1870
        %v1895 = vadd.f32 %v1777, %v1890
        %1896 = vrot.lane.b32.xlu0 %v1550, 1
        %v1897 = vpop.permute.xlu0 %1896
        %1898 = vrot.lane.b32.xlu0 %v1551, 1
        %v1899 = vpop.permute.xlu0 %1898
        %1900 = vrot.lane.b32.xlu0 %v1552, 1
        %v1901 = vpop.permute.xlu0 %1900
        %1902 = vrot.lane.b32.xlu0 %v1553, 1
        %v1903 = vpop.permute.xlu0 %1902
        %v1904 = vsel %vm802, %v1901, %v1903
        %v1905 = vsel %vm802, %v1899, %v1901
        %v1906 = vsel %vm802, %v1897, %v1899
        %v1907 = vsel %vm802, %v1903, %v1897
        %v1908 = vmul.f32 %v1907, %v810
        %v1909 = vmul.f32 %v1906, %v811
        %v1910 = vmul.f32 %v1905, %v812
        %v1911 = vmul.f32 %v1904, %v813
        %s1912 = scalar_lea.vmem %s4, 12
        %v1913 = vld [vmem:[%s1912] sm:$0xf]
        %v1915 = vsel %vm473, %v1913, 0
        %v1918 = vsel %vm477, %v1908, 0
        %v1921 = vsel %vm477, %v1909, 0
        %v1924 = vsel %vm477, %v1910, 0
        %v1927 = vsel %vm477, %v1911, 0
        %1929 = vmatpush.msra.mxu0 0.0
        %1930 = vmatpush.msra.mxu0 0.0
        %1931 = vmatpush.msra.mxu0 0.0
        %1932 = vmatpush.msra.mxu0 0.0
        %1933 = vmatpush.msra.mxu0 0.0
        %1934 = vmatpush.msra.mxu0 0.0
        %1935 = vmatpush.msra.mxu0 0.0
        %1936 = vmatpush.msra.mxu0 0.0
        %1937 = vmatpush.msra.mxu0 0.0
        %1938 = vmatpush.msra.mxu0 0.0
        %1939 = vmatpush.msra.mxu0 0.0
        %1940 = vmatpush.msra.mxu0 0.0
        %1941 = vmatpush.msra.mxu0 0.0
        %1942 = vmatpush.msra.mxu0 0.0
        %1943 = vmatpush.msra.mxu0 0.0
        %1944 = vmatpush.msra.mxu0 %v1918
        %1945 = vmatmul.f32.gmra.mxu0 %v1915
        %v1946 = vpop.f32.mrf.mxu0
        %v1947 = vadd.f32 0.0, %v1946
        %1948 = vdwg.mxu0
        %1949 = vmatpush.msra.mxu0 0.0
        %1950 = vmatpush.msra.mxu0 0.0
        %1951 = vmatpush.msra.mxu0 0.0
        %1952 = vmatpush.msra.mxu0 0.0
        %1953 = vmatpush.msra.mxu0 0.0
        %1954 = vmatpush.msra.mxu0 0.0
        %1955 = vmatpush.msra.mxu0 0.0
        %1956 = vmatpush.msra.mxu0 0.0
        %1957 = vmatpush.msra.mxu0 0.0
        %1958 = vmatpush.msra.mxu0 0.0
        %1959 = vmatpush.msra.mxu0 0.0
        %1960 = vmatpush.msra.mxu0 0.0
        %1961 = vmatpush.msra.mxu0 0.0
        %1962 = vmatpush.msra.mxu0 0.0
        %1963 = vmatpush.msra.mxu0 0.0
        %1964 = vmatpush.msra.mxu0 %v1921
        %1965 = vmatmul.f32.gmra.mxu0 %v1915
        %v1966 = vpop.f32.mrf.mxu0
        %v1967 = vadd.f32 0.0, %v1966
        %1968 = vdwg.mxu0
        %1969 = vmatpush.msra.mxu0 0.0
        %1970 = vmatpush.msra.mxu0 0.0
        %1971 = vmatpush.msra.mxu0 0.0
        %1972 = vmatpush.msra.mxu0 0.0
        %1973 = vmatpush.msra.mxu0 0.0
        %1974 = vmatpush.msra.mxu0 0.0
        %1975 = vmatpush.msra.mxu0 0.0
        %1976 = vmatpush.msra.mxu0 0.0
        %1977 = vmatpush.msra.mxu0 0.0
        %1978 = vmatpush.msra.mxu0 0.0
        %1979 = vmatpush.msra.mxu0 0.0
        %1980 = vmatpush.msra.mxu0 0.0
        %1981 = vmatpush.msra.mxu0 0.0
        %1982 = vmatpush.msra.mxu0 0.0
        %1983 = vmatpush.msra.mxu0 0.0
        %1984 = vmatpush.msra.mxu0 %v1924
        %1985 = vmatmul.f32.gmra.mxu0 %v1915
        %v1986 = vpop.f32.mrf.mxu0
        %v1987 = vadd.f32 0.0, %v1986
        %1988 = vdwg.mxu0
        %1989 = vmatpush.msra.mxu0 0.0
        %1990 = vmatpush.msra.mxu0 0.0
        %1991 = vmatpush.msra.mxu0 0.0
        %1992 = vmatpush.msra.mxu0 0.0
        %1993 = vmatpush.msra.mxu0 0.0
        %1994 = vmatpush.msra.mxu0 0.0
        %1995 = vmatpush.msra.mxu0 0.0
        %1996 = vmatpush.msra.mxu0 0.0
        %1997 = vmatpush.msra.mxu0 0.0
        %1998 = vmatpush.msra.mxu0 0.0
        %1999 = vmatpush.msra.mxu0 0.0
        %2000 = vmatpush.msra.mxu0 0.0
        %2001 = vmatpush.msra.mxu0 0.0
        %2002 = vmatpush.msra.mxu0 0.0
        %2003 = vmatpush.msra.mxu0 0.0
        %2004 = vmatpush.msra.mxu0 %v1927
        %2005 = vmatmul.f32.gmra.mxu0 %v1915
        %v2006 = vpop.f32.mrf.mxu0
        %v2007 = vadd.f32 0.0, %v2006
        %2008 = vdwg.mxu0
        %v2009 = vadd.f32 %v1892, %v1947
        %v2010 = vadd.f32 %v1893, %v1967
        %v2011 = vadd.f32 %v1894, %v1987
        %v2012 = vadd.f32 %v1895, %v2007
        %s2013 = scalar_lea.vmem %s4, 16
        %v2014 = vld [vmem:[%s2013] sm:$0xf]
        %v2016 = vsel %vm473, %v2014, 0
        %v2019 = vsel %vm477, %v1550, 0
        %v2022 = vsel %vm477, %v1551, 0
        %v2025 = vsel %vm477, %v1552, 0
        %v2028 = vsel %vm477, %v1553, 0
        %2030 = vmatpush.msra.mxu0 0.0
        %2031 = vmatpush.msra.mxu0 0.0
        %2032 = vmatpush.msra.mxu0 0.0
        %2033 = vmatpush.msra.mxu0 0.0
        %2034 = vmatpush.msra.mxu0 0.0
        %2035 = vmatpush.msra.mxu0 0.0
        %2036 = vmatpush.msra.mxu0 0.0
        %2037 = vmatpush.msra.mxu0 0.0
        %2038 = vmatpush.msra.mxu0 0.0
        %2039 = vmatpush.msra.mxu0 0.0
        %2040 = vmatpush.msra.mxu0 0.0
        %2041 = vmatpush.msra.mxu0 0.0
        %2042 = vmatpush.msra.mxu0 0.0
        %2043 = vmatpush.msra.mxu0 0.0
        %2044 = vmatpush.msra.mxu0 0.0
        %2045 = vmatpush.msra.mxu0 %v2019
        %2046 = vmatmul.f32.gmra.mxu0 %v2016
        %v2047 = vpop.f32.mrf.mxu0
        %v2048 = vadd.f32 0.0, %v2047
        %2049 = vdwg.mxu0
        %2050 = vmatpush.msra.mxu0 0.0
        %2051 = vmatpush.msra.mxu0 0.0
        %2052 = vmatpush.msra.mxu0 0.0
        %2053 = vmatpush.msra.mxu0 0.0
        %2054 = vmatpush.msra.mxu0 0.0
        %2055 = vmatpush.msra.mxu0 0.0
        %2056 = vmatpush.msra.mxu0 0.0
        %2057 = vmatpush.msra.mxu0 0.0
        %2058 = vmatpush.msra.mxu0 0.0
        %2059 = vmatpush.msra.mxu0 0.0
        %2060 = vmatpush.msra.mxu0 0.0
        %2061 = vmatpush.msra.mxu0 0.0
        %2062 = vmatpush.msra.mxu0 0.0
        %2063 = vmatpush.msra.mxu0 0.0
        %2064 = vmatpush.msra.mxu0 0.0
        %2065 = vmatpush.msra.mxu0 %v2022
        %2066 = vmatmul.f32.gmra.mxu0 %v2016
        %v2067 = vpop.f32.mrf.mxu0
        %v2068 = vadd.f32 0.0, %v2067
        %2069 = vdwg.mxu0
        %2070 = vmatpush.msra.mxu0 0.0
        %2071 = vmatpush.msra.mxu0 0.0
        %2072 = vmatpush.msra.mxu0 0.0
        %2073 = vmatpush.msra.mxu0 0.0
        %2074 = vmatpush.msra.mxu0 0.0
        %2075 = vmatpush.msra.mxu0 0.0
        %2076 = vmatpush.msra.mxu0 0.0
        %2077 = vmatpush.msra.mxu0 0.0
        %2078 = vmatpush.msra.mxu0 0.0
        %2079 = vmatpush.msra.mxu0 0.0
        %2080 = vmatpush.msra.mxu0 0.0
        %2081 = vmatpush.msra.mxu0 0.0
        %2082 = vmatpush.msra.mxu0 0.0
        %2083 = vmatpush.msra.mxu0 0.0
        %2084 = vmatpush.msra.mxu0 0.0
        %2085 = vmatpush.msra.mxu0 %v2025
        %2086 = vmatmul.f32.gmra.mxu0 %v2016
        %v2087 = vpop.f32.mrf.mxu0
        %v2088 = vadd.f32 0.0, %v2087
        %2089 = vdwg.mxu0
        %2090 = vmatpush.msra.mxu0 0.0
        %2091 = vmatpush.msra.mxu0 0.0
        %2092 = vmatpush.msra.mxu0 0.0
        %2093 = vmatpush.msra.mxu0 0.0
        %2094 = vmatpush.msra.mxu0 0.0
        %2095 = vmatpush.msra.mxu0 0.0
        %2096 = vmatpush.msra.mxu0 0.0
        %2097 = vmatpush.msra.mxu0 0.0
        %2098 = vmatpush.msra.mxu0 0.0
        %2099 = vmatpush.msra.mxu0 0.0
        %2100 = vmatpush.msra.mxu0 0.0
        %2101 = vmatpush.msra.mxu0 0.0
        %2102 = vmatpush.msra.mxu0 0.0
        %2103 = vmatpush.msra.mxu0 0.0
        %2104 = vmatpush.msra.mxu0 0.0
        %2105 = vmatpush.msra.mxu0 %v2028
        %2106 = vmatmul.f32.gmra.mxu0 %v2016
        %v2107 = vpop.f32.mrf.mxu0
        %v2108 = vadd.f32 0.0, %v2107
        %2109 = vdwg.mxu0
        %v2110 = vadd.f32 %v2009, %v2048
        %v2111 = vadd.f32 %v2010, %v2068
        %v2112 = vadd.f32 %v2011, %v2088
        %v2113 = vadd.f32 %v2012, %v2108
        %2114 = vrot.lane.b32.xlu0 %v1550, 127
        %v2115 = vpop.permute.xlu0 %2114
        %2116 = vrot.lane.b32.xlu0 %v1551, 127
        %v2117 = vpop.permute.xlu0 %2116
        %2118 = vrot.lane.b32.xlu0 %v1552, 127
        %v2119 = vpop.permute.xlu0 %2118
        %2120 = vrot.lane.b32.xlu0 %v1553, 127
        %v2121 = vpop.permute.xlu0 %2120
        %v2122 = vsel %vm1028, %v2119, %v2121
        %v2123 = vsel %vm1028, %v2117, %v2119
        %v2124 = vsel %vm1028, %v2115, %v2117
        %v2125 = vsel %vm1028, %v2121, %v2115
        %v2126 = vmul.f32 %v2124, %v1036
        %v2127 = vmul.f32 %v2123, %v1037
        %v2128 = vmul.f32 %v2122, %v1038
        %v2129 = vmul.f32 %v2125, %v1039
        %s2130 = scalar_lea.vmem %s4, 20
        %v2131 = vld [vmem:[%s2130] sm:$0xf]
        %v2133 = vsel %vm473, %v2131, 0
        %v2136 = vsel %vm477, %v2126, 0
        %v2139 = vsel %vm477, %v2127, 0
        %v2142 = vsel %vm477, %v2128, 0
        %v2145 = vsel %vm477, %v2129, 0
        %2147 = vmatpush.msra.mxu0 0.0
        %2148 = vmatpush.msra.mxu0 0.0
        %2149 = vmatpush.msra.mxu0 0.0
        %2150 = vmatpush.msra.mxu0 0.0
        %2151 = vmatpush.msra.mxu0 0.0
        %2152 = vmatpush.msra.mxu0 0.0
        %2153 = vmatpush.msra.mxu0 0.0
        %2154 = vmatpush.msra.mxu0 0.0
        %2155 = vmatpush.msra.mxu0 0.0
        %2156 = vmatpush.msra.mxu0 0.0
        %2157 = vmatpush.msra.mxu0 0.0
        %2158 = vmatpush.msra.mxu0 0.0
        %2159 = vmatpush.msra.mxu0 0.0
        %2160 = vmatpush.msra.mxu0 0.0
        %2161 = vmatpush.msra.mxu0 0.0
        %2162 = vmatpush.msra.mxu0 %v2136
        %2163 = vmatmul.f32.gmra.mxu0 %v2133
        %v2164 = vpop.f32.mrf.mxu0
        %v2165 = vadd.f32 0.0, %v2164
        %2166 = vdwg.mxu0
        %2167 = vmatpush.msra.mxu0 0.0
        %2168 = vmatpush.msra.mxu0 0.0
        %2169 = vmatpush.msra.mxu0 0.0
        %2170 = vmatpush.msra.mxu0 0.0
        %2171 = vmatpush.msra.mxu0 0.0
        %2172 = vmatpush.msra.mxu0 0.0
        %2173 = vmatpush.msra.mxu0 0.0
        %2174 = vmatpush.msra.mxu0 0.0
        %2175 = vmatpush.msra.mxu0 0.0
        %2176 = vmatpush.msra.mxu0 0.0
        %2177 = vmatpush.msra.mxu0 0.0
        %2178 = vmatpush.msra.mxu0 0.0
        %2179 = vmatpush.msra.mxu0 0.0
        %2180 = vmatpush.msra.mxu0 0.0
        %2181 = vmatpush.msra.mxu0 0.0
        %2182 = vmatpush.msra.mxu0 %v2139
        %2183 = vmatmul.f32.gmra.mxu0 %v2133
        %v2184 = vpop.f32.mrf.mxu0
        %v2185 = vadd.f32 0.0, %v2184
        %2186 = vdwg.mxu0
        %2187 = vmatpush.msra.mxu0 0.0
        %2188 = vmatpush.msra.mxu0 0.0
        %2189 = vmatpush.msra.mxu0 0.0
        %2190 = vmatpush.msra.mxu0 0.0
        %2191 = vmatpush.msra.mxu0 0.0
        %2192 = vmatpush.msra.mxu0 0.0
        %2193 = vmatpush.msra.mxu0 0.0
        %2194 = vmatpush.msra.mxu0 0.0
        %2195 = vmatpush.msra.mxu0 0.0
        %2196 = vmatpush.msra.mxu0 0.0
        %2197 = vmatpush.msra.mxu0 0.0
        %2198 = vmatpush.msra.mxu0 0.0
        %2199 = vmatpush.msra.mxu0 0.0
        %2200 = vmatpush.msra.mxu0 0.0
        %2201 = vmatpush.msra.mxu0 0.0
        %2202 = vmatpush.msra.mxu0 %v2142
        %2203 = vmatmul.f32.gmra.mxu0 %v2133
        %v2204 = vpop.f32.mrf.mxu0
        %v2205 = vadd.f32 0.0, %v2204
        %2206 = vdwg.mxu0
        %2207 = vmatpush.msra.mxu0 0.0
        %2208 = vmatpush.msra.mxu0 0.0
        %2209 = vmatpush.msra.mxu0 0.0
        %2210 = vmatpush.msra.mxu0 0.0
        %2211 = vmatpush.msra.mxu0 0.0
        %2212 = vmatpush.msra.mxu0 0.0
        %2213 = vmatpush.msra.mxu0 0.0
        %2214 = vmatpush.msra.mxu0 0.0
        %2215 = vmatpush.msra.mxu0 0.0
        %2216 = vmatpush.msra.mxu0 0.0
        %2217 = vmatpush.msra.mxu0 0.0
        %2218 = vmatpush.msra.mxu0 0.0
        %2219 = vmatpush.msra.mxu0 0.0
        %2220 = vmatpush.msra.mxu0 0.0
        %2221 = vmatpush.msra.mxu0 0.0
        %2222 = vmatpush.msra.mxu0 %v2145
        %2223 = vmatmul.f32.gmra.mxu0 %v2133
        %v2224 = vpop.f32.mrf.mxu0
        %v2225 = vadd.f32 0.0, %v2224
        %2226 = vdwg.mxu0
        %v2227 = vadd.f32 %v2110, %v2165
        %v2228 = vadd.f32 %v2111, %v2185
        %v2229 = vadd.f32 %v2112, %v2205
        %v2230 = vadd.f32 %v2113, %v2225
        %2231 = vrot.lane.b32.xlu0 %v1550, 113
        %v2232 = vpop.permute.xlu0 %2231
        %2233 = vrot.lane.b32.xlu0 %v1551, 113
        %v2234 = vpop.permute.xlu0 %2233
        %2235 = vrot.lane.b32.xlu0 %v1552, 113
        %v2236 = vpop.permute.xlu0 %2235
        %2237 = vrot.lane.b32.xlu0 %v1553, 113
        %v2238 = vpop.permute.xlu0 %2237
        %v2239 = vsel %vm1157, %v2236, %v2238
        %v2240 = vsel %vm1157, %v2234, %v2236
        %v2241 = vsel %vm1157, %v2232, %v2234
        %v2242 = vsel %vm1157, %v2238, %v2232
        %v2243 = vmul.f32 %v2241, %v1165
        %v2244 = vmul.f32 %v2240, %v1166
        %v2245 = vmul.f32 %v2239, %v1167
        %v2246 = vmul.f32 %v2242, %v1168
        %s2247 = scalar_lea.vmem %s4, 24
        %v2248 = vld [vmem:[%s2247] sm:$0xf]
        %v2250 = vsel %vm473, %v2248, 0
        %v2253 = vsel %vm477, %v2243, 0
        %v2256 = vsel %vm477, %v2244, 0
        %v2259 = vsel %vm477, %v2245, 0
        %v2262 = vsel %vm477, %v2246, 0
        %2264 = vmatpush.msra.mxu0 0.0
        %2265 = vmatpush.msra.mxu0 0.0
        %2266 = vmatpush.msra.mxu0 0.0
        %2267 = vmatpush.msra.mxu0 0.0
        %2268 = vmatpush.msra.mxu0 0.0
        %2269 = vmatpush.msra.mxu0 0.0
        %2270 = vmatpush.msra.mxu0 0.0
        %2271 = vmatpush.msra.mxu0 0.0
        %2272 = vmatpush.msra.mxu0 0.0
        %2273 = vmatpush.msra.mxu0 0.0
        %2274 = vmatpush.msra.mxu0 0.0
        %2275 = vmatpush.msra.mxu0 0.0
        %2276 = vmatpush.msra.mxu0 0.0
        %2277 = vmatpush.msra.mxu0 0.0
        %2278 = vmatpush.msra.mxu0 0.0
        %2279 = vmatpush.msra.mxu0 %v2253
        %2280 = vmatmul.f32.gmra.mxu0 %v2250
        %v2281 = vpop.f32.mrf.mxu0
        %v2282 = vadd.f32 0.0, %v2281
        %2283 = vdwg.mxu0
        %2284 = vmatpush.msra.mxu0 0.0
        %2285 = vmatpush.msra.mxu0 0.0
        %2286 = vmatpush.msra.mxu0 0.0
        %2287 = vmatpush.msra.mxu0 0.0
        %2288 = vmatpush.msra.mxu0 0.0
        %2289 = vmatpush.msra.mxu0 0.0
        %2290 = vmatpush.msra.mxu0 0.0
        %2291 = vmatpush.msra.mxu0 0.0
        %2292 = vmatpush.msra.mxu0 0.0
        %2293 = vmatpush.msra.mxu0 0.0
        %2294 = vmatpush.msra.mxu0 0.0
        %2295 = vmatpush.msra.mxu0 0.0
        %2296 = vmatpush.msra.mxu0 0.0
        %2297 = vmatpush.msra.mxu0 0.0
        %2298 = vmatpush.msra.mxu0 0.0
        %2299 = vmatpush.msra.mxu0 %v2256
        %2300 = vmatmul.f32.gmra.mxu0 %v2250
        %v2301 = vpop.f32.mrf.mxu0
        %v2302 = vadd.f32 0.0, %v2301
        %2303 = vdwg.mxu0
        %2304 = vmatpush.msra.mxu0 0.0
        %2305 = vmatpush.msra.mxu0 0.0
        %2306 = vmatpush.msra.mxu0 0.0
        %2307 = vmatpush.msra.mxu0 0.0
        %2308 = vmatpush.msra.mxu0 0.0
        %2309 = vmatpush.msra.mxu0 0.0
        %2310 = vmatpush.msra.mxu0 0.0
        %2311 = vmatpush.msra.mxu0 0.0
        %2312 = vmatpush.msra.mxu0 0.0
        %2313 = vmatpush.msra.mxu0 0.0
        %2314 = vmatpush.msra.mxu0 0.0
        %2315 = vmatpush.msra.mxu0 0.0
        %2316 = vmatpush.msra.mxu0 0.0
        %2317 = vmatpush.msra.mxu0 0.0
        %2318 = vmatpush.msra.mxu0 0.0
        %2319 = vmatpush.msra.mxu0 %v2259
        %2320 = vmatmul.f32.gmra.mxu0 %v2250
        %v2321 = vpop.f32.mrf.mxu0
        %v2322 = vadd.f32 0.0, %v2321
        %2323 = vdwg.mxu0
        %2324 = vmatpush.msra.mxu0 0.0
        %2325 = vmatpush.msra.mxu0 0.0
        %2326 = vmatpush.msra.mxu0 0.0
        %2327 = vmatpush.msra.mxu0 0.0
        %2328 = vmatpush.msra.mxu0 0.0
        %2329 = vmatpush.msra.mxu0 0.0
        %2330 = vmatpush.msra.mxu0 0.0
        %2331 = vmatpush.msra.mxu0 0.0
        %2332 = vmatpush.msra.mxu0 0.0
        %2333 = vmatpush.msra.mxu0 0.0
        %2334 = vmatpush.msra.mxu0 0.0
        %2335 = vmatpush.msra.mxu0 0.0
        %2336 = vmatpush.msra.mxu0 0.0
        %2337 = vmatpush.msra.mxu0 0.0
        %2338 = vmatpush.msra.mxu0 0.0
        %2339 = vmatpush.msra.mxu0 %v2262
        %2340 = vmatmul.f32.gmra.mxu0 %v2250
        %v2341 = vpop.f32.mrf.mxu0
        %v2342 = vadd.f32 0.0, %v2341
        %2343 = vdwg.mxu0
        %v2344 = vadd.f32 %v2227, %v2282
        %v2345 = vadd.f32 %v2228, %v2302
        %v2346 = vadd.f32 %v2229, %v2322
        %v2347 = vadd.f32 %v2230, %v2342
        %2348 = vrot.lane.b32.xlu0 %v1550, 112
        %v2349 = vpop.permute.xlu0 %2348
        %2350 = vrot.lane.b32.xlu0 %v1551, 112
        %v2351 = vpop.permute.xlu0 %2350
        %2352 = vrot.lane.b32.xlu0 %v1552, 112
        %v2353 = vpop.permute.xlu0 %2352
        %2354 = vrot.lane.b32.xlu0 %v1553, 112
        %v2355 = vpop.permute.xlu0 %2354
        %v2356 = vsel %vm1286, %v2353, %v2355
        %v2357 = vsel %vm1286, %v2351, %v2353
        %v2358 = vsel %vm1286, %v2349, %v2351
        %v2359 = vsel %vm1286, %v2355, %v2349
        %v2360 = vmul.f32 %v2358, %v1294
        %v2361 = vmul.f32 %v2357, %v1295
        %v2362 = vmul.f32 %v2356, %v1296
        %v2363 = vmul.f32 %v2359, %v1297
        %s2364 = scalar_lea.vmem %s4, 28
        %v2365 = vld [vmem:[%s2364] sm:$0xf]
        %v2367 = vsel %vm473, %v2365, 0
        %v2370 = vsel %vm477, %v2360, 0
        %v2373 = vsel %vm477, %v2361, 0
        %v2376 = vsel %vm477, %v2362, 0
        %v2379 = vsel %vm477, %v2363, 0
        %2381 = vmatpush.msra.mxu0 0.0
        %2382 = vmatpush.msra.mxu0 0.0
        %2383 = vmatpush.msra.mxu0 0.0
        %2384 = vmatpush.msra.mxu0 0.0
        %2385 = vmatpush.msra.mxu0 0.0
        %2386 = vmatpush.msra.mxu0 0.0
        %2387 = vmatpush.msra.mxu0 0.0
        %2388 = vmatpush.msra.mxu0 0.0
        %2389 = vmatpush.msra.mxu0 0.0
        %2390 = vmatpush.msra.mxu0 0.0
        %2391 = vmatpush.msra.mxu0 0.0
        %2392 = vmatpush.msra.mxu0 0.0
        %2393 = vmatpush.msra.mxu0 0.0
        %2394 = vmatpush.msra.mxu0 0.0
        %2395 = vmatpush.msra.mxu0 0.0
        %2396 = vmatpush.msra.mxu0 %v2370
        %2397 = vmatmul.f32.gmra.mxu0 %v2367
        %v2398 = vpop.f32.mrf.mxu0
        %v2399 = vadd.f32 0.0, %v2398
        %2400 = vdwg.mxu0
        %2401 = vmatpush.msra.mxu0 0.0
        %2402 = vmatpush.msra.mxu0 0.0
        %2403 = vmatpush.msra.mxu0 0.0
        %2404 = vmatpush.msra.mxu0 0.0
        %2405 = vmatpush.msra.mxu0 0.0
        %2406 = vmatpush.msra.mxu0 0.0
        %2407 = vmatpush.msra.mxu0 0.0
        %2408 = vmatpush.msra.mxu0 0.0
        %2409 = vmatpush.msra.mxu0 0.0
        %2410 = vmatpush.msra.mxu0 0.0
        %2411 = vmatpush.msra.mxu0 0.0
        %2412 = vmatpush.msra.mxu0 0.0
        %2413 = vmatpush.msra.mxu0 0.0
        %2414 = vmatpush.msra.mxu0 0.0
        %2415 = vmatpush.msra.mxu0 0.0
        %2416 = vmatpush.msra.mxu0 %v2373
        %2417 = vmatmul.f32.gmra.mxu0 %v2367
        %v2418 = vpop.f32.mrf.mxu0
        %v2419 = vadd.f32 0.0, %v2418
        %2420 = vdwg.mxu0
        %2421 = vmatpush.msra.mxu0 0.0
        %2422 = vmatpush.msra.mxu0 0.0
        %2423 = vmatpush.msra.mxu0 0.0
        %2424 = vmatpush.msra.mxu0 0.0
        %2425 = vmatpush.msra.mxu0 0.0
        %2426 = vmatpush.msra.mxu0 0.0
        %2427 = vmatpush.msra.mxu0 0.0
        %2428 = vmatpush.msra.mxu0 0.0
        %2429 = vmatpush.msra.mxu0 0.0
        %2430 = vmatpush.msra.mxu0 0.0
        %2431 = vmatpush.msra.mxu0 0.0
        %2432 = vmatpush.msra.mxu0 0.0
        %2433 = vmatpush.msra.mxu0 0.0
        %2434 = vmatpush.msra.mxu0 0.0
        %2435 = vmatpush.msra.mxu0 0.0
        %2436 = vmatpush.msra.mxu0 %v2376
        %2437 = vmatmul.f32.gmra.mxu0 %v2367
        %v2438 = vpop.f32.mrf.mxu0
        %v2439 = vadd.f32 0.0, %v2438
        %2440 = vdwg.mxu0
        %2441 = vmatpush.msra.mxu0 0.0
        %2442 = vmatpush.msra.mxu0 0.0
        %2443 = vmatpush.msra.mxu0 0.0
        %2444 = vmatpush.msra.mxu0 0.0
        %2445 = vmatpush.msra.mxu0 0.0
        %2446 = vmatpush.msra.mxu0 0.0
        %2447 = vmatpush.msra.mxu0 0.0
        %2448 = vmatpush.msra.mxu0 0.0
        %2449 = vmatpush.msra.mxu0 0.0
        %2450 = vmatpush.msra.mxu0 0.0
        %2451 = vmatpush.msra.mxu0 0.0
        %2452 = vmatpush.msra.mxu0 0.0
        %2453 = vmatpush.msra.mxu0 0.0
        %2454 = vmatpush.msra.mxu0 0.0
        %2455 = vmatpush.msra.mxu0 0.0
        %2456 = vmatpush.msra.mxu0 %v2379
        %2457 = vmatmul.f32.gmra.mxu0 %v2367
        %v2458 = vpop.f32.mrf.mxu0
        %v2459 = vadd.f32 0.0, %v2458
        %2460 = vdwg.mxu0
        %v2461 = vadd.f32 %v2344, %v2399
        %v2462 = vadd.f32 %v2345, %v2419
        %v2463 = vadd.f32 %v2346, %v2439
        %v2464 = vadd.f32 %v2347, %v2459
        %2465 = vrot.lane.b32.xlu0 %v1550, 111
        %v2466 = vpop.permute.xlu0 %2465
        %2467 = vrot.lane.b32.xlu0 %v1551, 111
        %v2468 = vpop.permute.xlu0 %2467
        %2469 = vrot.lane.b32.xlu0 %v1552, 111
        %v2470 = vpop.permute.xlu0 %2469
        %2471 = vrot.lane.b32.xlu0 %v1553, 111
        %v2472 = vpop.permute.xlu0 %2471
        %v2473 = vsel %vm1415, %v2470, %v2472
        %v2474 = vsel %vm1415, %v2468, %v2470
        %v2475 = vsel %vm1415, %v2466, %v2468
        %v2476 = vsel %vm1415, %v2472, %v2466
        %v2477 = vmul.f32 %v2475, %v1423
        %v2478 = vmul.f32 %v2474, %v1424
        %v2479 = vmul.f32 %v2473, %v1425
        %v2480 = vmul.f32 %v2476, %v1426
        %s2481 = scalar_lea.vmem %s4, 32
        %v2482 = vld [vmem:[%s2481] sm:$0xf]
        %v2484 = vsel %vm473, %v2482, 0
        %v2487 = vsel %vm477, %v2477, 0
        %v2490 = vsel %vm477, %v2478, 0
        %v2493 = vsel %vm477, %v2479, 0
        %v2496 = vsel %vm477, %v2480, 0
        %2498 = vmatpush.msra.mxu0 0.0
        %2499 = vmatpush.msra.mxu0 0.0
        %2500 = vmatpush.msra.mxu0 0.0
        %2501 = vmatpush.msra.mxu0 0.0
        %2502 = vmatpush.msra.mxu0 0.0
        %2503 = vmatpush.msra.mxu0 0.0
        %2504 = vmatpush.msra.mxu0 0.0
        %2505 = vmatpush.msra.mxu0 0.0
        %2506 = vmatpush.msra.mxu0 0.0
        %2507 = vmatpush.msra.mxu0 0.0
        %2508 = vmatpush.msra.mxu0 0.0
        %2509 = vmatpush.msra.mxu0 0.0
        %2510 = vmatpush.msra.mxu0 0.0
        %2511 = vmatpush.msra.mxu0 0.0
        %2512 = vmatpush.msra.mxu0 0.0
        %2513 = vmatpush.msra.mxu0 %v2487
        %2514 = vmatmul.f32.gmra.mxu0 %v2484
        %v2515 = vpop.f32.mrf.mxu0
        %v2516 = vadd.f32 0.0, %v2515
        %2517 = vdwg.mxu0
        %2518 = vmatpush.msra.mxu0 0.0
        %2519 = vmatpush.msra.mxu0 0.0
        %2520 = vmatpush.msra.mxu0 0.0
        %2521 = vmatpush.msra.mxu0 0.0
        %2522 = vmatpush.msra.mxu0 0.0
        %2523 = vmatpush.msra.mxu0 0.0
        %2524 = vmatpush.msra.mxu0 0.0
        %2525 = vmatpush.msra.mxu0 0.0
        %2526 = vmatpush.msra.mxu0 0.0
        %2527 = vmatpush.msra.mxu0 0.0
        %2528 = vmatpush.msra.mxu0 0.0
        %2529 = vmatpush.msra.mxu0 0.0
        %2530 = vmatpush.msra.mxu0 0.0
        %2531 = vmatpush.msra.mxu0 0.0
        %2532 = vmatpush.msra.mxu0 0.0
        %2533 = vmatpush.msra.mxu0 %v2490
        %2534 = vmatmul.f32.gmra.mxu0 %v2484
        %v2535 = vpop.f32.mrf.mxu0
        %v2536 = vadd.f32 0.0, %v2535
        %2537 = vdwg.mxu0
        %2538 = vmatpush.msra.mxu0 0.0
        %2539 = vmatpush.msra.mxu0 0.0
        %2540 = vmatpush.msra.mxu0 0.0
        %2541 = vmatpush.msra.mxu0 0.0
        %2542 = vmatpush.msra.mxu0 0.0
        %2543 = vmatpush.msra.mxu0 0.0
        %2544 = vmatpush.msra.mxu0 0.0
        %2545 = vmatpush.msra.mxu0 0.0
        %2546 = vmatpush.msra.mxu0 0.0
        %2547 = vmatpush.msra.mxu0 0.0
        %2548 = vmatpush.msra.mxu0 0.0
        %2549 = vmatpush.msra.mxu0 0.0
        %2550 = vmatpush.msra.mxu0 0.0
        %2551 = vmatpush.msra.mxu0 0.0
        %2552 = vmatpush.msra.mxu0 0.0
        %2553 = vmatpush.msra.mxu0 %v2493
        %2554 = vmatmul.f32.gmra.mxu0 %v2484
        %v2555 = vpop.f32.mrf.mxu0
        %v2556 = vadd.f32 0.0, %v2555
        %2557 = vdwg.mxu0
        %2558 = vmatpush.msra.mxu0 0.0
        %2559 = vmatpush.msra.mxu0 0.0
        %2560 = vmatpush.msra.mxu0 0.0
        %2561 = vmatpush.msra.mxu0 0.0
        %2562 = vmatpush.msra.mxu0 0.0
        %2563 = vmatpush.msra.mxu0 0.0
        %2564 = vmatpush.msra.mxu0 0.0
        %2565 = vmatpush.msra.mxu0 0.0
        %2566 = vmatpush.msra.mxu0 0.0
        %2567 = vmatpush.msra.mxu0 0.0
        %2568 = vmatpush.msra.mxu0 0.0
        %2569 = vmatpush.msra.mxu0 0.0
        %2570 = vmatpush.msra.mxu0 0.0
        %2571 = vmatpush.msra.mxu0 0.0
        %2572 = vmatpush.msra.mxu0 0.0
        %2573 = vmatpush.msra.mxu0 %v2496
        %2574 = vmatmul.f32.gmra.mxu0 %v2484
        %v2575 = vpop.f32.mrf.mxu0
        %v2576 = vadd.f32 0.0, %v2575
        %2577 = vdwg.mxu0
        %v2578 = vadd.f32 %v2461, %v2516
        %v2579 = vadd.f32 %v2462, %v2536
        %v2580 = vadd.f32 %v2463, %v2556
        %v2581 = vadd.f32 %v2464, %v2576
        %v2582 = vld [vmem:[%s5] sm:$0xf]
        %2584 = vset.pattern.permute.xlu0 0
        %2585 = vperm.xlu0 %2584, %v2582
        %v2586 = vpop.permute.xlu0 %2585
        %v2588 = vadd.f32 %v2578, %v2586
        %v2589 = vadd.f32 %v2579, %v2586
        %v2590 = vadd.f32 %v2580, %v2586
        %v2591 = vadd.f32 %v2581, %v2586
        %v2592 = vmax.f32 %v2588, 0.0
        %v2593 = vmax.f32 %v2589, 0.0
        %v2594 = vmax.f32 %v2590, 0.0
        %v2595 = vmax.f32 %v2591, 0.0
        %v2596 = vadd.f32 %v403, %v2592
        %v2597 = vadd.f32 %v404, %v2593
        %v2598 = vadd.f32 %v409, %v2594
        %v2599 = vadd.f32 %v410, %v2595
        %v2600 = vrot.slane %v1551, 4
        %v2601 = vsel %vm477, %v1550, %v2600
        %2603 = vst [vmem:[%s379] sm:$0xff] %v2601
        %v2606 = vrot.slane %v2597, 4
        %v2607 = vsel %vm477, %v2596, %v2606
        %s2609 = scalar_lea.vmem %s379, 8 [#allocation4]
        %2610 = vst [vmem:[%s2609] sm:$0xff] %v2607
        %v2611 = vrot.slane %v1553, 4
        %v2612 = vsel %vm477, %v1552, %v2611
        %s2614 = scalar_lea.vmem %s379, 16 [#allocation4]
        %2615 = vst [vmem:[%s2614] sm:$0xff] %v2612
        %v2618 = vrot.slane %v2599, 4
        %v2619 = vsel %vm477, %v2598, %v2618
        %s2621 = scalar_lea.vmem %s379, 24 [#allocation4]
        %2622 = vst [vmem:[%s2621] sm:$0xff] %v2619
        %s2623 = sand.u32 %s186, 1
        %s2624 = scalar_lea.sflag [#allocation5], %s2623
        %s2625 = sand.u32 %s186, 1
        %s2626 = smul.addr %s2625, 32
        %s2627 = scalar_lea.vmem [#allocation4], %s2626
        // Predicated region
        $region125: #{_coupling_call.1} parent=115 // pred_check
          %p2628 = pneg %p196
        $region126: #{_coupling_call.1} parent=115 // pred_check_branch
          %2630 = sbr.rel (%p2628) target = $region128
        $region127: #{_coupling_call.1} parent=115 // pred_region
          %s2631 = smul.u32 2, %s21
          %2633 = vsyncadd %s2624, 0
          %s2634 = smul.addr %s2631, 4
          %s2635 = smul.addr %s2634, 4
          %s2636 = scalar_lea.hbm %s7, %s2635
          %s2637 = sshll.u32 %s2627, 4
          %s2638 = int_to_ptr.vmem [resolvable:$true] %s2637
          %s2639 = sshll.u32 %s2636, 4
          %s2640 = int_to_ptr.hbm [resolvable:$true] %s2639
          %2645 = dma.vmem_to_hbm [thread:$0]  %s2638, 512, %s2640, %s2624, 128, 128, 8
        $region128: #{_coupling_call.1} parent=115 // pred_fallthru
          _
      $region116: #{_coupling_call.1} parent=5 // pred_fallthru
        _
      %p2646 = scmp.le.s32.totalorder 2, %s16
      // Predicated region
      $region129: #{_coupling_call.1} parent=5 // pred_check
        %p2647 = pneg %p2646
      $region130: #{_coupling_call.1} parent=5 // pred_check_branch
        %2649 = sbr.rel (%p2647) target = $region132
      $region131: #{_coupling_call.1} parent=5 // pred_region
        %s2650 = ssub.s32 %s16, 2
        // Predicated region
        $region133: #{_coupling_call.1} parent=131 // pred_check
          %p2651 = pneg %p202
        $region134: #{_coupling_call.1} parent=131 // pred_check_branch
          %2653 = sbr.rel (%p2651) target = $region136
        $region135: #{_coupling_call.1} parent=131 // pred_region
          %s2654 = sand.u32 %s187, 1
          %s2655 = scalar_lea.sflag [#allocation5], %s2654
          %s2656 = sand.u32 %s187, 1
          %s2657 = smul.addr %s2656, 32
          %s2658 = scalar_lea.vmem [#allocation4], %s2657
          %2660 = dma.done %s2655, 512
        $region136: #{_coupling_call.1} parent=131 // pred_fallthru
          _
      $region132: #{_coupling_call.1} parent=5 // pred_fallthru
        _
    $region6: #{_coupling_call.1} parent=1 // loop_footer
      %s20 = sadd.s32 1, %s16
    $region7: #{_coupling_call.1} parent=1 // loop_footer_branch
      %15 = sbr.rel target = $region3
    $region8: #{_coupling_call.1} parent=1 // loop_exit
      _
    %2661 = vsyncpa [#allocation5], 1
    %s2662 = scalar_lea.sflag [#allocation5], 1
    %2663 = vsyncpa %s2662, 1

</llo_original>
